<compile_context>
chip_gen: v7x
topology: tpu7x:2x2x1
jax: 0.10.0
libtpu: 0.0.40
codegen_flags: <defaults>
</compile_context>

<pallas_src>
import jax
import jax.numpy as jnp
from jax.experimental import pallas as pl
from jax.experimental.pallas import tpu as pltpu

# ---------------- model dims (small, synthetic, consistent with the module) ----------------
B, LQ, LK = 2, 8, 8
D, H = 32, 4
DK = D // H
DFF = 64
EPS = 1e-6


# ---------------- wrapper-side packing helpers ----------------
def pack_params(wq, wk, wv, wo, w1, w2, bq, bk, bv, bo, g, beta, b1, b2):
    """Pack all matmul weights into one bf16 (128,128) slab and all (1, .) vectors
    into one f32 (8, 128) slab (fewer DMA descriptors, bf16 halves weight bytes)."""
    lanes = 4 * D                                                  # 128
    row_qkvo = jnp.concatenate([wq, wk, wv, wo], axis=1)           # (D, 4D)
    row_w1 = jnp.pad(w1, ((0, 0), (0, lanes - DFF)))               # (D, 4D)
    row_w2 = jnp.pad(w2, ((0, 0), (0, lanes - D)))                 # (DFF, 4D)
    w_slab = jnp.concatenate([row_qkvo, row_w1, row_w2], axis=0).astype(jnp.bfloat16)

    def row(v):
        return jnp.pad(v, ((0, 0), (0, lanes - v.shape[1])))

    vec_slab = jnp.concatenate(
        [row(bq),                                                  # row 0: bq
         row(jnp.concatenate([bk, bv], axis=1)),                   # row 1: [bk | bv]
         row(bo),                                                  # row 2: bo
         row(g),                                                   # row 3: ln gamma
         row(beta),                                                # row 4: ln beta
         row(b1),                                                  # row 5: b1
         row(b2),                                                  # row 6: b2
         jnp.zeros((1, lanes), jnp.float32)],                      # row 7: pad to 8 sublanes
        axis=0).astype(jnp.float32)
    return w_slab, vec_slab


def build_attn_bias(mask, bb):
    """Additive attention bias (nb, bb*LQ, bb*LK), f32.

    Combines the user mask (mask==0 -> -1e9, else 0) with a block-diagonal term so the `bb`
    examples folded onto the row axis cannot attend across each other.  Numerically identical
    to the reference's where(mask==0, -1e9, scores) after softmax (exp underflows to 0)."""
    b, lq, lk = mask.shape
    nb = b // bb
    m = mask.reshape(nb, bb, lq, lk).astype(jnp.float32)
    eye = jnp.eye(bb, dtype=jnp.float32)[None, :, None, :, None]   # (1, bb, 1, bb, 1)
    keep = eye * m[:, :, :, None, :]                                # (nb, bb, lq, bb, lk)
    bias = (keep - 1.0) * jnp.float32(1e9)
    return bias.reshape(nb, bb * lq, bb * lk)


# ---------------- fused encoder-layer kernel ----------------
def encoder_layer(query, key, mask, w_slab, vec_slab, *, batch_block=None):
    """query: (B, LQ, D), key: (B, LK, D), mask: (B, LQ, LK) float32 {0,1}."""
    b, lq, d = query.shape
    _, lk, _ = key.shape
    bb = b if batch_block is None else batch_block
    assert b % bb == 0, "batch_block must divide the batch size"
    nb = b // bb
    rq, rk = bb * lq, bb * lk          # rows per batch block (query / key)

    q2 = query.reshape(b * lq, d)
    k2 = key.reshape(b * lk, d)
    bias = build_attn_bias(mask, bb)   # (nb, rq, rk) f32, built once wrapper-side

    def kernel(q_ref, k_ref, bias_ref, w_ref, vec_ref, out_ref):
        q_raw = q_ref[...]             # (rq, D) f32  (kept in f32 for residual 1)
        k_rows = k_ref[...]            # (rk, D) f32
        bias_b = bias_ref[0]           # (rq, rk) f32

        # --- carve packed parameters with static slices ---
        w_q = w_ref[0:D, 0:D]
        w_kv = w_ref[0:D, D:3 * D]
        w_o = w_ref[0:D, 3 * D:4 * D]
        w_1 = w_ref[D:2 * D, 0:DFF]
        w_2 = w_ref[2 * D:2 * D + DFF, 0:D]

        b_q = vec_ref[0:1, 0:D]
        b_kv = vec_ref[1:2, 0:2 * D]
        b_o = vec_ref[2:3, 0:D]
        ln_g = vec_ref[3:4, 0:D]
        ln_b = vec_ref[4:5, 0:D]
        b_1 = vec_ref[5:6, 0:DFF]
        b_2 = vec_ref[6:7, 0:D]

        # --- projections: bf16 MXU operands, f32 accumulate; no cross projections ---
        qp = jnp.dot(q_raw.astype(jnp.bfloat16), w_q,
                     preferred_element_type=jnp.float32) + b_q
        kv = jnp.dot(k_rows.astype(jnp.bfloat16), w_kv,
                     preferred_element_type=jnp.float32) + b_kv
        qp = qp * jnp.float32(1.0 / (DK ** 0.5))        # pre-scale queries once
        qp_bf = qp.astype(jnp.bfloat16)
        kp_bf = kv[:, 0:D].astype(jnp.bfloat16)
        vp_bf = kv[:, D:2 * D].astype(jnp.bfloat16)

        # --- per-head attention: one (rq x rk) score matmul per head over all folded rows;
        #     block-diagonal bias keeps examples separate; Wo fused per head (no concat) ---
        attn = None
        for h in range(H):                               # static, H = 4
            sl = slice(h * DK, (h + 1) * DK)
            s = jnp.einsum('qd,kd->qk', qp_bf[:, sl], kp_bf[:, sl],
                           preferred_element_type=jnp.float32) + bias_b
            s = s - jnp.max(s, axis=-1, keepdims=True)
            p = jnp.exp(s)
            p = p * pl.reciprocal(jnp.sum(p, axis=-1, keepdims=True), approx=True)
            ctx = jnp.dot(p.astype(jnp.bfloat16), vp_bf[:, sl],
                          preferred_element_type=jnp.float32)
            contrib = jnp.dot(ctx.astype(jnp.bfloat16), w_o[sl, :],
                              preferred_element_type=jnp.float32)
            attn = contrib if attn is None else attn + contrib

        y = q_raw + attn + b_o                           # residual 1 (raw query, no pre-norm)

        # --- LayerNorm (annotated transformer: unbiased std, eps added to std) ---
        mean = jnp.mean(y, axis=-1, keepdims=True)
        cent = y - mean
        var = jnp.sum(cent * cent, axis=-1, keepdims=True) * jnp.float32(1.0 / (D - 1))
        inv = pl.reciprocal(jnp.sqrt(var) + jnp.float32(EPS), approx=True)
        yn = ln_g * cent * inv + ln_b

        # --- position-wise feed forward ---
        h1 = jnp.dot(yn.astype(jnp.bfloat16), w_1, preferred_element_type=jnp.float32) + b_1
        h1 = jnp.maximum(h1, jnp.float32(0.0))
        ffn = jnp.dot(h1.astype(jnp.bfloat16), w_2, preferred_element_type=jnp.float32) + b_2

        out_ref[...] = y + ffn                           # residual 2

    out2d = pl.pallas_call(
        kernel,
        out_shape=jax.ShapeDtypeStruct((b * lq, d), jnp.float32),
        grid=(nb,),                                      # 1 step at this size; shards across
        in_specs=[                                       # v7x cores when B is scaled up
            pl.BlockSpec((rq, d), lambda i: (i, 0)),
            pl.BlockSpec((rk, d), lambda i: (i, 0)),
            pl.BlockSpec((1, rq, rk), lambda i: (i, 0, 0)),
            pl.BlockSpec(w_slab.shape, lambda i: (0, 0)),     # weights resident across steps
            pl.BlockSpec(vec_slab.shape, lambda i: (0, 0)),
        ],
        out_specs=pl.BlockSpec((rq, d), lambda i: (i, 0)),
        compiler_params=pltpu.CompilerParams(
            dimension_semantics=("parallel",)),
    )(q2, k2, bias, w_slab, vec_slab)
    return out2d.reshape(b, lq, d)


# ---------------- pure-JAX f32 reference (sanity check) ----------------
def reference(query, key, mask, params):
    (wq, bq, wk, bk, wv, bv, wo, bo, g, beta, w1, b1, w2, b2) = params
    qp = query @ wq + bq
    kp = key @ wk + bk
    vp = key @ wv + bv

    def split(x):  # (B, L, D) -> (B, H, L, DK)
        bsz, L, _ = x.shape
        return x.reshape(bsz, L, H, DK).transpose(0, 2, 1, 3)

    qh, kh, vh = split(qp), split(kp), split(vp)
    scores = jnp.einsum("bhqd,bhkd->bhqk", qh, kh) / jnp.sqrt(jnp.float32(DK))
    scores = jnp.where(mask[:, None, :, :] == 0.0, -1e9, scores)
    p = jax.nn.softmax(scores, axis=-1)
    ctx = jnp.einsum("bhqk,bhkd->bhqd", p, vh)
    ctx = ctx.transpose(0, 2, 1, 3).reshape(query.shape)
    attn_out = ctx @ wo + bo
    y = query + attn_out
    mean = jnp.mean(y, axis=-1, keepdims=True)
    std = jnp.sqrt(jnp.sum((y - mean) ** 2, axis=-1, keepdims=True) / (D - 1))
    yn = g * (y - mean) / (std + EPS) + beta
    ffn = jnp.maximum(yn @ w1 + b1, 0.0) @ w2 + b2
    return y + ffn


if __name__ == "__main__":
    rng = jax.random.PRNGKey(0)
    ks = jax.random.split(rng, 20)

    query = jax.random.normal(ks[0], (B, LQ, D), jnp.float32)
    key_in = jax.random.normal(ks[1], (B, LK, D), jnp.float32)
    # mask: keep most positions, mask out the last key position for batch 0
    mask = jnp.ones((B, LQ, LK), jnp.float32).at[0, :, -1].set(0.0)

    s = 0.1
    wq = s * jax.random.normal(ks[2], (D, D), jnp.float32)
    wk = s * jax.random.normal(ks[3], (D, D), jnp.float32)
    wv = s * jax.random.normal(ks[4], (D, D), jnp.float32)
    wo = s * jax.random.normal(ks[5], (D, D), jnp.float32)
    w1 = s * jax.random.normal(ks[6], (D, DFF), jnp.float32)
    w2 = s * jax.random.normal(ks[7], (DFF, D), jnp.float32)
    # non-trivial biases / affine so the packed-slab plumbing is actually exercised
    bq = s * jax.random.normal(ks[8], (1, D), jnp.float32)
    bk = s * jax.random.normal(ks[9], (1, D), jnp.float32)
    bv = s * jax.random.normal(ks[10], (1, D), jnp.float32)
    bo = s * jax.random.normal(ks[11], (1, D), jnp.float32)
    g = 1.0 + s * jax.random.normal(ks[12], (1, D), jnp.float32)     # LayerNorm gamma
    beta = s * jax.random.normal(ks[13], (1, D), jnp.float32)        # LayerNorm beta
    b1 = s * jax.random.normal(ks[14], (1, DFF), jnp.float32)
    b2 = s * jax.random.normal(ks[15], (1, D), jnp.float32)

    raw_params = (wq, bq, wk, bk, wv, bv, wo, bo, g, beta, w1, b1, w2, b2)
    w_slab, vec_slab = pack_params(wq, wk, wv, wo, w1, w2,
                                   bq, bk, bv, bo, g, beta, b1, b2)

    out = encoder_layer(query, key_in, mask, w_slab, vec_slab)
    out = jax.block_until_ready(out)

    ref = reference(query, key_in, mask, raw_params)
    assert out.shape == (B, LQ, D)
    # tolerance reflects bf16 MXU operands (f32 accumulation) + approx EUP reciprocals;
    # genuine bugs produce O(0.1+) errors and are still caught.
    assert jnp.allclose(out, ref, atol=3e-2, rtol=3e-2), "mismatch vs JAX reference"

    print("KERNEL_OK")
</pallas_src>

<mosaic_0001>
module attributes {stable_mosaic.version = 11 : i64} {
  func.func @kernel(%arg0: i32, %arg1: memref<16x32xf32, #tpu.memory_space<vmem>>, %arg2: memref<16x32xf32, #tpu.memory_space<vmem>>, %arg3: memref<1x16x16xf32, #tpu.memory_space<vmem>>, %arg4: memref<128x128xbf16, #tpu.memory_space<vmem>>, %arg5: memref<8x128xf32, #tpu.memory_space<vmem>>, %arg6: memref<16x32xf32, #tpu.memory_space<vmem>>) attributes {dimension_semantics = [#tpu.dimension_semantics<parallel>], iteration_bounds = array<i64: 1>, scalar_prefetch = 0 : i64, scratch_operands = 0 : i64, tpu.core_type = #tpu.core_type<tc>, window_params = [{transform_indices = @transform_0, window_bounds = array<i64: 16, 32>}, {transform_indices = @transform_1, window_bounds = array<i64: 16, 32>}, {transform_indices = @transform_2, window_bounds = array<i64: 1, 16, 16>}, {pipeline_mode = #tpu.pipeline_mode<synchronous>, transform_indices = @transform_3, window_bounds = array<i64: 128, 128>}, {pipeline_mode = #tpu.pipeline_mode<synchronous>, transform_indices = @transform_4, window_bounds = array<i64: 8, 128>}, {transform_indices = @transform_5, window_bounds = array<i64: 16, 32>}]} {
    %c0 = arith.constant 0 : index
    %c0_0 = arith.constant 0 : index
    %0 = vector.load %arg1[%c0, %c0_0] : memref<16x32xf32, #tpu.memory_space<vmem>>, vector<16x32xf32>
    %c0_1 = arith.constant 0 : index
    %c0_2 = arith.constant 0 : index
    %1 = vector.load %arg2[%c0_1, %c0_2] : memref<16x32xf32, #tpu.memory_space<vmem>>, vector<16x32xf32>
    %c0_3 = arith.constant 0 : index
    %c0_4 = arith.constant 0 : index
    %c0_5 = arith.constant 0 : index
    %2 = vector.load %arg3[%c0_3, %c0_4, %c0_5] : memref<1x16x16xf32, #tpu.memory_space<vmem>>, vector<1x16x16xf32>
    %3 = vector.shape_cast %2 : vector<1x16x16xf32> to vector<16x16xf32>
    %c0_6 = arith.constant 0 : index
    %c0_7 = arith.constant 0 : index
    %4 = vector.load %arg4[%c0_6, %c0_7] : memref<128x128xbf16, #tpu.memory_space<vmem>>, vector<32x32xbf16>
    %c0_8 = arith.constant 0 : index
    %c32 = arith.constant 32 : index
    %5 = vector.load %arg4[%c0_8, %c32] : memref<128x128xbf16, #tpu.memory_space<vmem>>, vector<32x64xbf16>
    %c0_9 = arith.constant 0 : index
    %c96 = arith.constant 96 : index
    %6 = vector.load %arg4[%c0_9, %c96] : memref<128x128xbf16, #tpu.memory_space<vmem>>, vector<32x32xbf16>
    %c32_10 = arith.constant 32 : index
    %c0_11 = arith.constant 0 : index
    %7 = vector.load %arg4[%c32_10, %c0_11] : memref<128x128xbf16, #tpu.memory_space<vmem>>, vector<32x64xbf16>
    %c64 = arith.constant 64 : index
    %c0_12 = arith.constant 0 : index
    %8 = vector.load %arg4[%c64, %c0_12] : memref<128x128xbf16, #tpu.memory_space<vmem>>, vector<64x32xbf16>
    %c0_13 = arith.constant 0 : index
    %c0_14 = arith.constant 0 : index
    %9 = vector.load %arg5[%c0_13, %c0_14] : memref<8x128xf32, #tpu.memory_space<vmem>>, vector<1x32xf32>
    %c1 = arith.constant 1 : index
    %c0_15 = arith.constant 0 : index
    %10 = vector.load %arg5[%c1, %c0_15] : memref<8x128xf32, #tpu.memory_space<vmem>>, vector<1x64xf32>
    %c2 = arith.constant 2 : index
    %c0_16 = arith.constant 0 : index
    %11 = vector.load %arg5[%c2, %c0_16] : memref<8x128xf32, #tpu.memory_space<vmem>>, vector<1x32xf32>
    %c3 = arith.constant 3 : index
    %c0_17 = arith.constant 0 : index
    %12 = vector.load %arg5[%c3, %c0_17] : memref<8x128xf32, #tpu.memory_space<vmem>>, vector<1x32xf32>
    %c4 = arith.constant 4 : index
    %c0_18 = arith.constant 0 : index
    %13 = vector.load %arg5[%c4, %c0_18] : memref<8x128xf32, #tpu.memory_space<vmem>>, vector<1x32xf32>
    %c5 = arith.constant 5 : index
    %c0_19 = arith.constant 0 : index
    %14 = vector.load %arg5[%c5, %c0_19] : memref<8x128xf32, #tpu.memory_space<vmem>>, vector<1x64xf32>
    %c6 = arith.constant 6 : index
    %c0_20 = arith.constant 0 : index
    %15 = vector.load %arg5[%c6, %c0_20] : memref<8x128xf32, #tpu.memory_space<vmem>>, vector<1x32xf32>
    %16 = arith.truncf %0 : vector<16x32xf32> to vector<16x32xbf16>
    %cst = arith.constant dense<0.000000e+00> : vector<16x32xf32>
    %17 = tpu.matmul %16, %4, %cst {dimension_numbers = #tpu.dot_dimension_numbers<[1], [0], [0], [1], [0, 0, 1, 1], [], []>} : vector<16x32xbf16>, vector<32x32xbf16>, vector<16x32xf32> -> vector<16x32xf32>
    %18 = vector.broadcast %9 : vector<1x32xf32> to vector<16x32xf32>
    %19 = arith.addf %17, %18 : vector<16x32xf32>
    %20 = arith.truncf %1 : vector<16x32xf32> to vector<16x32xbf16>
    %cst_21 = arith.constant dense<0.000000e+00> : vector<16x64xf32>
    %21 = tpu.matmul %20, %5, %cst_21 {dimension_numbers = #tpu.dot_dimension_numbers<[1], [0], [0], [1], [0, 0, 1, 1], [], []>} : vector<16x32xbf16>, vector<32x64xbf16>, vector<16x64xf32> -> vector<16x64xf32>
    %22 = vector.broadcast %10 : vector<1x64xf32> to vector<16x64xf32>
    %23 = arith.addf %21, %22 : vector<16x64xf32>
    %cst_22 = arith.constant 0.353553385 : f32
    %24 = vector.broadcast %cst_22 : f32 to vector<16x32xf32>
    %25 = arith.mulf %19, %24 : vector<16x32xf32>
    %26 = arith.truncf %25 : vector<16x32xf32> to vector<16x32xbf16>
    %27 = vector.extract_strided_slice %23 {offsets = [0, 0], sizes = [16, 32], strides = [1, 1]} : vector<16x64xf32> to vector<16x32xf32>
    %28 = arith.truncf %27 : vector<16x32xf32> to vector<16x32xbf16>
    %29 = vector.extract_strided_slice %23 {offsets = [0, 32], sizes = [16, 32], strides = [1, 1]} : vector<16x64xf32> to vector<16x32xf32>
    %30 = arith.truncf %29 : vector<16x32xf32> to vector<16x32xbf16>
    %31 = vector.extract_strided_slice %26 {offsets = [0, 0], sizes = [16, 8], strides = [1, 1]} : vector<16x32xbf16> to vector<16x8xbf16>
    %32 = vector.extract_strided_slice %28 {offsets = [0, 0], sizes = [16, 8], strides = [1, 1]} : vector<16x32xbf16> to vector<16x8xbf16>
    "tpu.trace_start"() <{level = 10 : i32, message = "qd,kd->qk"}> : () -> ()
    %cst_23 = arith.constant dense<0.000000e+00> : vector<16x16xf32>
    %33 = tpu.matmul %31, %32, %cst_23 {dimension_numbers = #tpu.dot_dimension_numbers<[1], [1], [0], [0], [0, 0, 1, 0], [], []>} : vector<16x8xbf16>, vector<16x8xbf16>, vector<16x16xf32> -> vector<16x16xf32>
    "tpu.trace_stop"() : () -> ()
    %34 = arith.addf %33, %3 : vector<16x16xf32>
    %cst_24 = arith.constant dense<0xFF800000> : vector<16xf32>
    %35 = vector.multi_reduction <maximumf>, %34, %cst_24 [1] : vector<16x16xf32> to vector<16xf32>
    %36 = vector.shape_cast %35 : vector<16xf32> to vector<16x1xf32>
    %37 = vector.broadcast %36 : vector<16x1xf32> to vector<16x16xf32>
    %38 = arith.subf %34, %37 : vector<16x16xf32>
    %39 = math.exp %38 : vector<16x16xf32>
    %cst_25 = arith.constant dense<0.000000e+00> : vector<16xf32>
    %40 = vector.multi_reduction <add>, %39, %cst_25 [1] : vector<16x16xf32> to vector<16xf32>
    %41 = vector.shape_cast %40 : vector<16xf32> to vector<16x1xf32>
    %42 = tpu.reciprocal %41 {approx = true} : vector<16x1xf32> -> vector<16x1xf32>
    %43 = vector.broadcast %42 : vector<16x1xf32> to vector<16x16xf32>
    %44 = arith.mulf %39, %43 : vector<16x16xf32>
    %45 = arith.truncf %44 : vector<16x16xf32> to vector<16x16xbf16>
    %46 = vector.extract_strided_slice %30 {offsets = [0, 0], sizes = [16, 8], strides = [1, 1]} : vector<16x32xbf16> to vector<16x8xbf16>
    %cst_26 = arith.constant dense<0.000000e+00> : vector<16x8xf32>
    %47 = tpu.matmul %45, %46, %cst_26 {dimension_numbers = #tpu.dot_dimension_numbers<[1], [0], [0], [1], [0, 0, 1, 1], [], []>} : vector<16x16xbf16>, vector<16x8xbf16>, vector<16x8xf32> -> vector<16x8xf32>
    %48 = arith.truncf %47 : vector<16x8xf32> to vector<16x8xbf16>
    %49 = vector.extract_strided_slice %6 {offsets = [0, 0], sizes = [8, 32], strides = [1, 1]} : vector<32x32xbf16> to vector<8x32xbf16>
    %cst_27 = arith.constant dense<0.000000e+00> : vector<16x32xf32>
    %50 = tpu.matmul %48, %49, %cst_27 {dimension_numbers = #tpu.dot_dimension_numbers<[1], [0], [0], [1], [0, 0, 1, 1], [], []>} : vector<16x8xbf16>, vector<8x32xbf16>, vector<16x32xf32> -> vector<16x32xf32>
    %51 = vector.extract_strided_slice %26 {offsets = [0, 8], sizes = [16, 8], strides = [1, 1]} : vector<16x32xbf16> to vector<16x8xbf16>
    %52 = vector.extract_strided_slice %28 {offsets = [0, 8], sizes = [16, 8], strides = [1, 1]} : vector<16x32xbf16> to vector<16x8xbf16>
    "tpu.trace_start"() <{level = 10 : i32, message = "qd,kd->qk"}> : () -> ()
    %cst_28 = arith.constant dense<0.000000e+00> : vector<16x16xf32>
    %53 = tpu.matmul %51, %52, %cst_28 {dimension_numbers = #tpu.dot_dimension_numbers<[1], [1], [0], [0], [0, 0, 1, 0], [], []>} : vector<16x8xbf16>, vector<16x8xbf16>, vector<16x16xf32> -> vector<16x16xf32>
    "tpu.trace_stop"() : () -> ()
    %54 = arith.addf %53, %3 : vector<16x16xf32>
    %cst_29 = arith.constant dense<0xFF800000> : vector<16xf32>
    %55 = vector.multi_reduction <maximumf>, %54, %cst_29 [1] : vector<16x16xf32> to vector<16xf32>
    %56 = vector.shape_cast %55 : vector<16xf32> to vector<16x1xf32>
    %57 = vector.broadcast %56 : vector<16x1xf32> to vector<16x16xf32>
    %58 = arith.subf %54, %57 : vector<16x16xf32>
    %59 = math.exp %58 : vector<16x16xf32>
    %cst_30 = arith.constant dense<0.000000e+00> : vector<16xf32>
    %60 = vector.multi_reduction <add>, %59, %cst_30 [1] : vector<16x16xf32> to vector<16xf32>
    %61 = vector.shape_cast %60 : vector<16xf32> to vector<16x1xf32>
    %62 = tpu.reciprocal %61 {approx = true} : vector<16x1xf32> -> vector<16x1xf32>
    %63 = vector.broadcast %62 : vector<16x1xf32> to vector<16x16xf32>
    %64 = arith.mulf %59, %63 : vector<16x16xf32>
    %65 = arith.truncf %64 : vector<16x16xf32> to vector<16x16xbf16>
    %66 = vector.extract_strided_slice %30 {offsets = [0, 8], sizes = [16, 8], strides = [1, 1]} : vector<16x32xbf16> to vector<16x8xbf16>
    %cst_31 = arith.constant dense<0.000000e+00> : vector<16x8xf32>
    %67 = tpu.matmul %65, %66, %cst_31 {dimension_numbers = #tpu.dot_dimension_numbers<[1], [0], [0], [1], [0, 0, 1, 1], [], []>} : vector<16x16xbf16>, vector<16x8xbf16>, vector<16x8xf32> -> vector<16x8xf32>
    %68 = arith.truncf %67 : vector<16x8xf32> to vector<16x8xbf16>
    %69 = vector.extract_strided_slice %6 {offsets = [8, 0], sizes = [8, 32], strides = [1, 1]} : vector<32x32xbf16> to vector<8x32xbf16>
    %cst_32 = arith.constant dense<0.000000e+00> : vector<16x32xf32>
    %70 = tpu.matmul %68, %69, %cst_32 {dimension_numbers = #tpu.dot_dimension_numbers<[1], [0], [0], [1], [0, 0, 1, 1], [], []>} : vector<16x8xbf16>, vector<8x32xbf16>, vector<16x32xf32> -> vector<16x32xf32>
    %71 = arith.addf %50, %70 : vector<16x32xf32>
    %72 = vector.extract_strided_slice %26 {offsets = [0, 16], sizes = [16, 8], strides = [1, 1]} : vector<16x32xbf16> to vector<16x8xbf16>
    %73 = vector.extract_strided_slice %28 {offsets = [0, 16], sizes = [16, 8], strides = [1, 1]} : vector<16x32xbf16> to vector<16x8xbf16>
    "tpu.trace_start"() <{level = 10 : i32, message = "qd,kd->qk"}> : () -> ()
    %cst_33 = arith.constant dense<0.000000e+00> : vector<16x16xf32>
    %74 = tpu.matmul %72, %73, %cst_33 {dimension_numbers = #tpu.dot_dimension_numbers<[1], [1], [0], [0], [0, 0, 1, 0], [], []>} : vector<16x8xbf16>, vector<16x8xbf16>, vector<16x16xf32> -> vector<16x16xf32>
    "tpu.trace_stop"() : () -> ()
    %75 = arith.addf %74, %3 : vector<16x16xf32>
    %cst_34 = arith.constant dense<0xFF800000> : vector<16xf32>
    %76 = vector.multi_reduction <maximumf>, %75, %cst_34 [1] : vector<16x16xf32> to vector<16xf32>
    %77 = vector.shape_cast %76 : vector<16xf32> to vector<16x1xf32>
    %78 = vector.broadcast %77 : vector<16x1xf32> to vector<16x16xf32>
    %79 = arith.subf %75, %78 : vector<16x16xf32>
    %80 = math.exp %79 : vector<16x16xf32>
    %cst_35 = arith.constant dense<0.000000e+00> : vector<16xf32>
    %81 = vector.multi_reduction <add>, %80, %cst_35 [1] : vector<16x16xf32> to vector<16xf32>
    %82 = vector.shape_cast %81 : vector<16xf32> to vector<16x1xf32>
    %83 = tpu.reciprocal %82 {approx = true} : vector<16x1xf32> -> vector<16x1xf32>
    %84 = vector.broadcast %83 : vector<16x1xf32> to vector<16x16xf32>
    %85 = arith.mulf %80, %84 : vector<16x16xf32>
    %86 = arith.truncf %85 : vector<16x16xf32> to vector<16x16xbf16>
    %87 = vector.extract_strided_slice %30 {offsets = [0, 16], sizes = [16, 8], strides = [1, 1]} : vector<16x32xbf16> to vector<16x8xbf16>
    %cst_36 = arith.constant dense<0.000000e+00> : vector<16x8xf32>
    %88 = tpu.matmul %86, %87, %cst_36 {dimension_numbers = #tpu.dot_dimension_numbers<[1], [0], [0], [1], [0, 0, 1, 1], [], []>} : vector<16x16xbf16>, vector<16x8xbf16>, vector<16x8xf32> -> vector<16x8xf32>
    %89 = arith.truncf %88 : vector<16x8xf32> to vector<16x8xbf16>
    %90 = vector.extract_strided_slice %6 {offsets = [16, 0], sizes = [8, 32], strides = [1, 1]} : vector<32x32xbf16> to vector<8x32xbf16>
    %cst_37 = arith.constant dense<0.000000e+00> : vector<16x32xf32>
    %91 = tpu.matmul %89, %90, %cst_37 {dimension_numbers = #tpu.dot_dimension_numbers<[1], [0], [0], [1], [0, 0, 1, 1], [], []>} : vector<16x8xbf16>, vector<8x32xbf16>, vector<16x32xf32> -> vector<16x32xf32>
    %92 = arith.addf %71, %91 : vector<16x32xf32>
    %93 = vector.extract_strided_slice %26 {offsets = [0, 24], sizes = [16, 8], strides = [1, 1]} : vector<16x32xbf16> to vector<16x8xbf16>
    %94 = vector.extract_strided_slice %28 {offsets = [0, 24], sizes = [16, 8], strides = [1, 1]} : vector<16x32xbf16> to vector<16x8xbf16>
    "tpu.trace_start"() <{level = 10 : i32, message = "qd,kd->qk"}> : () -> ()
    %cst_38 = arith.constant dense<0.000000e+00> : vector<16x16xf32>
    %95 = tpu.matmul %93, %94, %cst_38 {dimension_numbers = #tpu.dot_dimension_numbers<[1], [1], [0], [0], [0, 0, 1, 0], [], []>} : vector<16x8xbf16>, vector<16x8xbf16>, vector<16x16xf32> -> vector<16x16xf32>
    "tpu.trace_stop"() : () -> ()
    %96 = arith.addf %95, %3 : vector<16x16xf32>
    %cst_39 = arith.constant dense<0xFF800000> : vector<16xf32>
    %97 = vector.multi_reduction <maximumf>, %96, %cst_39 [1] : vector<16x16xf32> to vector<16xf32>
    %98 = vector.shape_cast %97 : vector<16xf32> to vector<16x1xf32>
    %99 = vector.broadcast %98 : vector<16x1xf32> to vector<16x16xf32>
    %100 = arith.subf %96, %99 : vector<16x16xf32>
    %101 = math.exp %100 : vector<16x16xf32>
    %cst_40 = arith.constant dense<0.000000e+00> : vector<16xf32>
    %102 = vector.multi_reduction <add>, %101, %cst_40 [1] : vector<16x16xf32> to vector<16xf32>
    %103 = vector.shape_cast %102 : vector<16xf32> to vector<16x1xf32>
    %104 = tpu.reciprocal %103 {approx = true} : vector<16x1xf32> -> vector<16x1xf32>
    %105 = vector.broadcast %104 : vector<16x1xf32> to vector<16x16xf32>
    %106 = arith.mulf %101, %105 : vector<16x16xf32>
    %107 = arith.truncf %106 : vector<16x16xf32> to vector<16x16xbf16>
    %108 = vector.extract_strided_slice %30 {offsets = [0, 24], sizes = [16, 8], strides = [1, 1]} : vector<16x32xbf16> to vector<16x8xbf16>
    %cst_41 = arith.constant dense<0.000000e+00> : vector<16x8xf32>
    %109 = tpu.matmul %107, %108, %cst_41 {dimension_numbers = #tpu.dot_dimension_numbers<[1], [0], [0], [1], [0, 0, 1, 1], [], []>} : vector<16x16xbf16>, vector<16x8xbf16>, vector<16x8xf32> -> vector<16x8xf32>
    %110 = arith.truncf %109 : vector<16x8xf32> to vector<16x8xbf16>
    %111 = vector.extract_strided_slice %6 {offsets = [24, 0], sizes = [8, 32], strides = [1, 1]} : vector<32x32xbf16> to vector<8x32xbf16>
    %cst_42 = arith.constant dense<0.000000e+00> : vector<16x32xf32>
    %112 = tpu.matmul %110, %111, %cst_42 {dimension_numbers = #tpu.dot_dimension_numbers<[1], [0], [0], [1], [0, 0, 1, 1], [], []>} : vector<16x8xbf16>, vector<8x32xbf16>, vector<16x32xf32> -> vector<16x32xf32>
    %113 = arith.addf %92, %112 : vector<16x32xf32>
    %114 = arith.addf %0, %113 : vector<16x32xf32>
    %115 = vector.broadcast %11 : vector<1x32xf32> to vector<16x32xf32>
    %116 = arith.addf %114, %115 : vector<16x32xf32>
    %cst_43 = arith.constant dense<0.000000e+00> : vector<16xf32>
    %117 = vector.multi_reduction <add>, %116, %cst_43 [1] : vector<16x32xf32> to vector<16xf32>
    %118 = vector.shape_cast %117 : vector<16xf32> to vector<16x1xf32>
    %cst_44 = arith.constant 3.200000e+01 : f32
    %119 = vector.broadcast %cst_44 : f32 to vector<16x1xf32>
    %120 = arith.divf %118, %119 : vector<16x1xf32>
    %121 = vector.broadcast %120 : vector<16x1xf32> to vector<16x32xf32>
    %122 = arith.subf %116, %121 : vector<16x32xf32>
    %123 = arith.mulf %122, %122 : vector<16x32xf32>
    %cst_45 = arith.constant dense<0.000000e+00> : vector<16xf32>
    %124 = vector.multi_reduction <add>, %123, %cst_45 [1] : vector<16x32xf32> to vector<16xf32>
    %125 = vector.shape_cast %124 : vector<16xf32> to vector<16x1xf32>
    %cst_46 = arith.constant 0.0322580636 : f32
    %126 = vector.broadcast %cst_46 : f32 to vector<16x1xf32>
    %127 = arith.mulf %125, %126 : vector<16x1xf32>
    %128 = math.sqrt %127 : vector<16x1xf32>
    %cst_47 = arith.constant 9.99999997E-7 : f32
    %129 = vector.broadcast %cst_47 : f32 to vector<16x1xf32>
    %130 = arith.addf %128, %129 : vector<16x1xf32>
    %131 = tpu.reciprocal %130 {approx = true} : vector<16x1xf32> -> vector<16x1xf32>
    %132 = vector.broadcast %12 : vector<1x32xf32> to vector<16x32xf32>
    %133 = arith.mulf %132, %122 : vector<16x32xf32>
    %134 = vector.broadcast %131 : vector<16x1xf32> to vector<16x32xf32>
    %135 = arith.mulf %133, %134 : vector<16x32xf32>
    %136 = vector.broadcast %13 : vector<1x32xf32> to vector<16x32xf32>
    %137 = arith.addf %135, %136 : vector<16x32xf32>
    %138 = arith.truncf %137 : vector<16x32xf32> to vector<16x32xbf16>
    %cst_48 = arith.constant dense<0.000000e+00> : vector<16x64xf32>
    %139 = tpu.matmul %138, %7, %cst_48 {dimension_numbers = #tpu.dot_dimension_numbers<[1], [0], [0], [1], [0, 0, 1, 1], [], []>} : vector<16x32xbf16>, vector<32x64xbf16>, vector<16x64xf32> -> vector<16x64xf32>
    %140 = vector.broadcast %14 : vector<1x64xf32> to vector<16x64xf32>
    %141 = arith.addf %139, %140 : vector<16x64xf32>
    %cst_49 = arith.constant 0.000000e+00 : f32
    %142 = vector.broadcast %cst_49 : f32 to vector<16x64xf32>
    %143 = arith.maximumf %141, %142 : vector<16x64xf32>
    %144 = arith.truncf %143 : vector<16x64xf32> to vector<16x64xbf16>
    %cst_50 = arith.constant dense<0.000000e+00> : vector<16x32xf32>
    %145 = tpu.matmul %144, %8, %cst_50 {dimension_numbers = #tpu.dot_dimension_numbers<[1], [0], [0], [1], [0, 0, 1, 1], [], []>} : vector<16x64xbf16>, vector<64x32xbf16>, vector<16x32xf32> -> vector<16x32xf32>
    %146 = vector.broadcast %15 : vector<1x32xf32> to vector<16x32xf32>
    %147 = arith.addf %145, %146 : vector<16x32xf32>
    %148 = arith.addf %116, %147 : vector<16x32xf32>
    %c0_51 = arith.constant 0 : index
    %c0_52 = arith.constant 0 : index
    %149 = vector.load %arg6[%c0_51, %c0_52] : memref<16x32xf32, #tpu.memory_space<vmem>>, vector<16x32xf32>
    tpu.vector_store %arg6[%c0_51, %c0_52], %148 {strides = array<i32>} : memref<16x32xf32, #tpu.memory_space<vmem>>, vector<16x32xf32>,
    return
  }
  func.func @transform_0(%arg0: i32) -> (i32, i32) {
    %c0_i32 = arith.constant 0 : i32
    %c0_i32_0 = arith.constant 0 : i32
    return %arg0, %c0_i32 : i32, i32
  }
  func.func @transform_1(%arg0: i32) -> (i32, i32) {
    %c0_i32 = arith.constant 0 : i32
    %c0_i32_0 = arith.constant 0 : i32
    return %arg0, %c0_i32 : i32, i32
  }
  func.func @transform_2(%arg0: i32) -> (i32, i32, i32) {
    %c0_i32 = arith.constant 0 : i32
    %c0_i32_0 = arith.constant 0 : i32
    %c0_i32_1 = arith.constant 0 : i32
    return %arg0, %c0_i32, %c0_i32_0 : i32, i32, i32
  }
  func.func @transform_3(%arg0: i32) -> (i32, i32) {
    %c0_i32 = arith.constant 0 : i32
    %c0_i32_0 = arith.constant 0 : i32
    %c0_i32_1 = arith.constant 0 : i32
    return %c0_i32, %c0_i32_0 : i32, i32
  }
  func.func @transform_4(%arg0: i32) -> (i32, i32) {
    %c0_i32 = arith.constant 0 : i32
    %c0_i32_0 = arith.constant 0 : i32
    %c0_i32_1 = arith.constant 0 : i32
    return %c0_i32, %c0_i32_0 : i32, i32
  }
  func.func @transform_5(%arg0: i32) -> (i32, i32) {
    %c0_i32 = arith.constant 0 : i32
    %c0_i32_0 = arith.constant 0 : i32
    return %arg0, %c0_i32 : i32, i32
  }
}

</mosaic_0001>

<llo_original>
// kernel: tpu_custom_call.1
$region0: #{tpu_custom_call.1}
  #allocation0 [shape = 'u32[]', space=smem, size = 0x4, offset = 0x4, fixed_abs, tag = 'smem constant byte address 0x4 - core index']
  #allocation1 [shape = 'u32[144,128]{1,0:T(1,128)}', space=vmem, size = 0x12000, scoped, tag = 'internal scratch']
  %s0 = inlined_call_operand.hbm [shape: f32[16,32], index: 0, kind: input, shape index: {}]
  %s1 = inlined_call_operand.hbm [shape: f32[16,32], index: 1, kind: input, shape index: {}]
  %s2 = inlined_call_operand.hbm [shape: f32[1,16,16], index: 2, kind: input, shape index: {}]
  %s3 = inlined_call_operand.hbm [shape: bf16[128,128], index: 3, kind: input, shape index: {}]
  %s4 = inlined_call_operand.vmem [shape: f32[8,128], index: 4, kind: input, shape index: {}]
  %s5 = inlined_call_operand.hbm [shape: f32[16,32], index: 5, kind: output, shape index: {}]
  %s6 = sld [smem:[#allocation0]]
  $region46: #{tpu_custom_call.1} parent=0
    _
  %s8 = ssub.s32 1, %s6
  %s9 = scalar_select 0, %s8, %s6
  $region1: #{tpu_custom_call.1} parent=0
    #allocation2 [shape = 'u8[8192]{0}', space=vmem, size = 0x2000, scoped, tag = 'input window, operand 0, single buffered']
    #allocation3 [shape = 's32[1]{0}', space=sflag, size = 0x4, scoped, tag = 'scoped memory for tpu_custom_call.1']
    #allocation4 [shape = 's32[1]{0}', space=sflag, size = 0x4, scoped, tag = 'scoped memory for tpu_custom_call.1']
    #allocation5 [shape = 'u8[8192]{0}', space=vmem, size = 0x2000, scoped, tag = 'input window, operand 1, single buffered']
    #allocation6 [shape = 's32[1]{0}', space=sflag, size = 0x4, scoped, tag = 'scoped memory for tpu_custom_call.1']
    #allocation7 [shape = 'u8[8192]{0}', space=vmem, size = 0x2000, scoped, tag = 'input window, operand 2, single buffered']
    #allocation8 [shape = 'u8[32768]{0}', space=vmem, size = 0x8000, scoped, tag = 'input window, operand 3, single buffered']
    #allocation9 [shape = 's32[1]{0}', space=sflag, size = 0x4, scoped, tag = 'scoped memory for tpu_custom_call.1']
    #allocation10 [shape = 'u8[8192]{0}', space=vmem, size = 0x2000, scoped, tag = 'output window, operand 0, single buffered']
    %10 = vsyncpa [#allocation3], 0
    %11 = vsyncpa [#allocation6], 0
    %12 = vsyncpa [#allocation9], 0
    %13 = vsyncpa [#allocation4], 0
    // Predicated region
    $region2: #{tpu_custom_call.1} parent=1 // pred_check
      _
    $region3: #{tpu_custom_call.1} parent=1 // pred_check_branch
      %15 = sbr.rel (0) target = $region5
    $region4: #{tpu_custom_call.1} parent=1 // pred_region
      %s17 = ssub.s32 256, 256
      %18 = vsyncadd [#allocation3], %s17
      %s19 = sshll.u32 [#allocation2], 4
      %s20 = int_to_ptr.vmem [resolvable:$true] %s19
      %25 = dma.hbm_to_vmem [thread:$0]  %s0, 256, %s20, [#allocation3], 128, 128, 8
    $region5: #{tpu_custom_call.1} parent=1 // pred_fallthru
      _
    // Predicated region
    $region6: #{tpu_custom_call.1} parent=1 // pred_check
      _
    $region7: #{tpu_custom_call.1} parent=1 // pred_check_branch
      %27 = sbr.rel (0) target = $region9
    $region8: #{tpu_custom_call.1} parent=1 // pred_region
      %s29 = ssub.s32 256, 256
      %30 = vsyncadd [#allocation6], %s29
      %s31 = sshll.u32 [#allocation5], 4
      %s32 = int_to_ptr.vmem [resolvable:$true] %s31
      %37 = dma.hbm_to_vmem [thread:$0]  %s1, 256, %s32, [#allocation6], 128, 128, 8
    $region9: #{tpu_custom_call.1} parent=1 // pred_fallthru
      _
    // Predicated region
    $region10: #{tpu_custom_call.1} parent=1 // pred_check
      _
    $region11: #{tpu_custom_call.1} parent=1 // pred_check_branch
      %39 = sbr.rel (0) target = $region13
    $region12: #{tpu_custom_call.1} parent=1 // pred_region
      %s41 = ssub.s32 256, 256
      %42 = vsyncadd [#allocation6], %s41
      %s43 = sshll.u32 [#allocation7], 4
      %s44 = int_to_ptr.vmem [resolvable:$true] %s43
      %49 = dma.hbm_to_vmem [thread:$0]  %s2, 256, %s44, [#allocation6], 128, 128, 8
    $region13: #{tpu_custom_call.1} parent=1 // pred_fallthru
      _
    // Predicated region
    $region14: #{tpu_custom_call.1} parent=1 // pred_check
      _
    $region15: #{tpu_custom_call.1} parent=1 // pred_check_branch
      %51 = sbr.rel (0) target = $region17
    $region16: #{tpu_custom_call.1} parent=1 // pred_region
      %s53 = ssub.s32 1024, 1024
      %54 = vsyncadd [#allocation9], %s53
      %s55 = sshll.u32 [#allocation8], 4
      %s56 = int_to_ptr.vmem [resolvable:$true] %s55
      %61 = dma.hbm_to_vmem [thread:$0]  %s3, 1024, %s56, [#allocation9], 64, 64, 4
    $region17: #{tpu_custom_call.1} parent=1 // pred_fallthru
      _
    // Predicated region
    $region18: #{tpu_custom_call.1} parent=1 // pred_check
      _
    $region19: #{tpu_custom_call.1} parent=1 // pred_check_branch
      %63 = sbr.rel (0) target = $region21
    $region20: #{tpu_custom_call.1} parent=1 // pred_region
      _
    $region21: #{tpu_custom_call.1} parent=1 // pred_fallthru
      _
    // Predicated region
    $region22: #{tpu_custom_call.1} parent=1 // pred_check
      _
    $region23: #{tpu_custom_call.1} parent=1 // pred_check_branch
      %65 = sbr.rel (0) target = $region25
    $region24: #{tpu_custom_call.1} parent=1 // pred_region
      %66 = dma.done [#allocation3], 256
    $region25: #{tpu_custom_call.1} parent=1 // pred_fallthru
      _
    // Predicated region
    $region26: #{tpu_custom_call.1} parent=1 // pred_check
      _
    $region27: #{tpu_custom_call.1} parent=1 // pred_check_branch
      %68 = sbr.rel (0) target = $region29
    $region28: #{tpu_custom_call.1} parent=1 // pred_region
      %69 = dma.done [#allocation6], 256
    $region29: #{tpu_custom_call.1} parent=1 // pred_fallthru
      _
    // Predicated region
    $region30: #{tpu_custom_call.1} parent=1 // pred_check
      _
    $region31: #{tpu_custom_call.1} parent=1 // pred_check_branch
      %71 = sbr.rel (0) target = $region33
    $region32: #{tpu_custom_call.1} parent=1 // pred_region
      %72 = dma.done [#allocation6], 256
    $region33: #{tpu_custom_call.1} parent=1 // pred_fallthru
      _
    // Predicated region
    $region34: #{tpu_custom_call.1} parent=1 // pred_check
      _
    $region35: #{tpu_custom_call.1} parent=1 // pred_check_branch
      %74 = sbr.rel (0) target = $region37
    $region36: #{tpu_custom_call.1} parent=1 // pred_region
      %75 = dma.done [#allocation9], 1024
    $region37: #{tpu_custom_call.1} parent=1 // pred_fallthru
      _
    %v77 = vld [vmem:[#allocation2] sm:$0xff]
    %v78 = vld [vmem:[#allocation2 + $0x8] sm:$0xff]
    %v79 = vld [vmem:[#allocation5] sm:$0xff]
    %v80 = vld [vmem:[#allocation5 + $0x8] sm:$0xff]
    %v81 = vld [vmem:[#allocation7] sm:$0xff]
    %v82 = vld [vmem:[#allocation7 + $0x8] sm:$0xff]
    %v83 = vld [vmem:[#allocation8] sm:$0xf]
    %v84 = vld [vmem:[#allocation8 + $0x4] sm:$0xf]
    %v85 = vld [vmem:[#allocation8 + $0x8] sm:$0xf]
    %v86 = vld [vmem:[#allocation8 + $0xc] sm:$0xf]
    %v87 = vld [vmem:[#allocation8 + $0x10] sm:$0xf]
    %v88 = vld [vmem:[#allocation8 + $0x14] sm:$0xf]
    %v89 = vld [vmem:[#allocation8 + $0x18] sm:$0xf]
    %v90 = vld [vmem:[#allocation8 + $0x1c] sm:$0xf]
    %v91 = vld [vmem:[#allocation8 + $0x20] sm:$0xf]
    %v92 = vld [vmem:[#allocation8 + $0x24] sm:$0xf]
    %v93 = vld [vmem:[#allocation8 + $0x28] sm:$0xf]
    %v94 = vld [vmem:[#allocation8 + $0x2c] sm:$0xf]
    %v95 = vld [vmem:[#allocation8 + $0x30] sm:$0xf]
    %v96 = vld [vmem:[#allocation8 + $0x34] sm:$0xf]
    %v97 = vld [vmem:[#allocation8 + $0x38] sm:$0xf]
    %v98 = vld [vmem:[#allocation8 + $0x3c] sm:$0xf]
    %v99 = vld [vmem:[%s4] sm:$0x1]
    %v100 = vld [vmem:[%s4 + $0x1] sm:$0x1]
    %v101 = vld [vmem:[%s4 + $0x2] sm:$0x1]
    %v102 = vld [vmem:[%s4 + $0x3] sm:$0x1]
    %v103 = vld [vmem:[%s4 + $0x4] sm:$0x1]
    %v104 = vld [vmem:[%s4 + $0x5] sm:$0x1]
    %v105 = vld [vmem:[%s4 + $0x6] sm:$0x1]
    %v106 = vpack.c.bf16 %v78, %v77
    %v107 = vlaneseq
    %v108 = vshrl.u32 %v107, 7
    %v109 = vsub.s32 0, %v108
    %v110 = vrot.slane %v99, %v109
    %v115 = vunpack.c.l.b16 %v83
    %v116 = vunpack.c.l.b16 %v84
    %v117 = vunpack.c.l.b16 %v85
    %v118 = vunpack.c.l.b16 %v86
    %v119 = vpack.c.b16 %v116, %v115
    %v120 = vpack.c.b16 %v118, %v117
    %vm123 = vcmask 261120
    %v125 = vsel %vm123, %v106, 0
    %127 = vmatprep.subr.bf16.mxu0 0
    %128 = vmatpush1.bf16.msra.mxu0 %v119
    %129 = vmatprep.subr.bf16.mxu0 0
    %130 = vmatpush1.bf16.msra.mxu0 %v120
    %131 = vmatprep.subr.bf16.mxu0 0
    %132 = vmatpush1.bf16.msra.mxu0 0
    %133 = vmatprep.subr.bf16.mxu0 0
    %134 = vmatpush1.bf16.msra.mxu0 0
    %135 = vmatprep.subr.bf16.mxu0 0
    %136 = vmatpush1.bf16.msra.mxu0 0
    %137 = vmatprep.subr.bf16.mxu0 0
    %138 = vmatpush1.bf16.msra.mxu0 0
    %139 = vmatprep.subr.bf16.mxu0 0
    %140 = vmatpush1.bf16.msra.mxu0 0
    %141 = vmatprep.subr.bf16.mxu0 0
    %142 = vmatpush1.bf16.msra.mxu0 0
    %143 = vmatprep.subr.bf16.mxu0 0
    %144 = vmatpush1.bf16.msra.mxu0 0
    %145 = vmatprep.subr.bf16.mxu0 0
    %146 = vmatpush1.bf16.msra.mxu0 0
    %147 = vmatprep.subr.bf16.mxu0 0
    %148 = vmatpush1.bf16.msra.mxu0 0
    %149 = vmatprep.subr.bf16.mxu0 0
    %150 = vmatpush1.bf16.msra.mxu0 0
    %151 = vmatprep.subr.bf16.mxu0 0
    %152 = vmatpush1.bf16.msra.mxu0 0
    %153 = vmatprep.subr.bf16.mxu0 0
    %154 = vmatpush1.bf16.msra.mxu0 0
    %155 = vmatprep.subr.bf16.mxu0 0
    %156 = vmatpush1.bf16.msra.mxu0 0
    %157 = vmatprep.subr.bf16.mxu0 0
    %158 = vmatpush1.bf16.msra.mxu0 0
    %159 = vmatprep.mubr.bf16.mxu0 0
    %160 = vmatmul.mubr.bf16.gmra.mrb[0].mxu0 %v125
    %v161 = vpop.f32.mrb[0].mxu0
    %v162 = vadd.f32 %v110, %v161
    %v163 = vpop.f32.mrb[0].mxu0
    %v164 = vpop.f32.mrb[0].mxu0
    %v165 = vadd.f32 %v110, %v164
    %v166 = vpop.f32.mrb[0].mxu0
    %167 = vdwg.mxu0
    %v168 = vpack.c.bf16 %v80, %v79
    %v169 = vlaneseq
    %v170 = vshrl.u32 %v169, 7
    %v171 = vsub.s32 0, %v170
    %v172 = vrot.slane %v100, %v171
    %173 = vrot.lane.b32.xlu0 %v119, 96
    %v174 = vpop.permute.xlu0 %173
    %175 = vrot.lane.b32.xlu0 %v120, 96
    %v176 = vpop.permute.xlu0 %175
    %v180 = vsel %vm123, %v168, 0
    %182 = vmatprep.subr.bf16.mxu0 0
    %183 = vmatpush1.bf16.msra.mxu0 %v174
    %184 = vmatprep.subr.bf16.mxu0 0
    %185 = vmatpush1.bf16.msra.mxu0 %v176
    %186 = vmatprep.subr.bf16.mxu0 0
    %187 = vmatpush1.bf16.msra.mxu0 0
    %188 = vmatprep.subr.bf16.mxu0 0
    %189 = vmatpush1.bf16.msra.mxu0 0
    %190 = vmatprep.subr.bf16.mxu0 0
    %191 = vmatpush1.bf16.msra.mxu0 0
    %192 = vmatprep.subr.bf16.mxu0 0
    %193 = vmatpush1.bf16.msra.mxu0 0
    %194 = vmatprep.subr.bf16.mxu0 0
    %195 = vmatpush1.bf16.msra.mxu0 0
    %196 = vmatprep.subr.bf16.mxu0 0
    %197 = vmatpush1.bf16.msra.mxu0 0
    %198 = vmatprep.subr.bf16.mxu0 0
    %199 = vmatpush1.bf16.msra.mxu0 0
    %200 = vmatprep.subr.bf16.mxu0 0
    %201 = vmatpush1.bf16.msra.mxu0 0
    %202 = vmatprep.subr.bf16.mxu0 0
    %203 = vmatpush1.bf16.msra.mxu0 0
    %204 = vmatprep.subr.bf16.mxu0 0
    %205 = vmatpush1.bf16.msra.mxu0 0
    %206 = vmatprep.subr.bf16.mxu0 0
    %207 = vmatpush1.bf16.msra.mxu0 0
    %208 = vmatprep.subr.bf16.mxu0 0
    %209 = vmatpush1.bf16.msra.mxu0 0
    %210 = vmatprep.subr.bf16.mxu0 0
    %211 = vmatpush1.bf16.msra.mxu0 0
    %212 = vmatprep.subr.bf16.mxu0 0
    %213 = vmatpush1.bf16.msra.mxu0 0
    %214 = vmatprep.mubr.bf16.mxu0 0
    %215 = vmatmul.mubr.bf16.gmra.mrb[0].mxu0 %v180
    %v216 = vpop.f32.mrb[0].mxu0
    %v217 = vadd.f32 %v172, %v216
    %v218 = vpop.f32.mrb[0].mxu0
    %v219 = vpop.f32.mrb[0].mxu0
    %v220 = vadd.f32 %v172, %v219
    %v221 = vpop.f32.mrb[0].mxu0
    %222 = vdwg.mxu0
    %v223 = vmul.f32 %v162, 0.35355338
    %v224 = vmul.f32 %v165, 0.35355338
    %v225 = vpack.c.bf16 %v224, %v223
    %v226 = vpack.c.bf16 %v220, %v217
    %vm227 = vcmask 64512
    %v229 = vsel %vm227, %v225, 0
    %v232 = vsel %vm227, %v226, 0
    %234 = vmatprep.subr.bf16.mxu0 0
    %235 = vmatpush1.bf16.xpose.msra.mxu0 %v232
    %236 = vmatprep.subr.bf16.mxu0 0
    %237 = vmatpush1.bf16.xpose.msra.mxu0 0
    %238 = vmatprep.subr.bf16.mxu0 0
    %239 = vmatpush1.bf16.xpose.msra.mxu0 0
    %240 = vmatprep.subr.bf16.mxu0 0
    %241 = vmatpush1.bf16.xpose.msra.mxu0 0
    %242 = vmatprep.subr.bf16.mxu0 0
    %243 = vmatpush1.bf16.xpose.msra.mxu0 0
    %244 = vmatprep.subr.bf16.mxu0 0
    %245 = vmatpush1.bf16.xpose.msra.mxu0 0
    %246 = vmatprep.subr.bf16.mxu0 0
    %247 = vmatpush1.bf16.xpose.msra.mxu0 0
    %248 = vmatprep.subr.bf16.mxu0 0
    %249 = vmatpush1.bf16.xpose.msra.mxu0 0
    %250 = vmatprep.subr.bf16.mxu0 0
    %251 = vmatpush1.bf16.xpose.msra.mxu0 0
    %252 = vmatprep.subr.bf16.mxu0 0
    %253 = vmatpush1.bf16.xpose.msra.mxu0 0
    %254 = vmatprep.subr.bf16.mxu0 0
    %255 = vmatpush1.bf16.xpose.msra.mxu0 0
    %256 = vmatprep.subr.bf16.mxu0 0
    %257 = vmatpush1.bf16.xpose.msra.mxu0 0
    %258 = vmatprep.subr.bf16.mxu0 0
    %259 = vmatpush1.bf16.xpose.msra.mxu0 0
    %260 = vmatprep.subr.bf16.mxu0 0
    %261 = vmatpush1.bf16.xpose.msra.mxu0 0
    %262 = vmatprep.subr.bf16.mxu0 0
    %263 = vmatpush1.bf16.xpose.msra.mxu0 0
    %264 = vmatprep.subr.bf16.mxu0 0
    %265 = vmatpush1.bf16.xpose.msra.mxu0 0
    %266 = vmatprep.mubr.bf16.mxu0 0
    %267 = vmatmul.mubr.bf16.gmra.mrb[0].mxu0 %v229
    %v268 = vpop.f32.mrb[0].mxu0
    %v269 = vadd.f32 %v81, %v268
    %v270 = vpop.f32.mrb[0].mxu0
    %v271 = vpop.f32.mrb[0].mxu0
    %v272 = vadd.f32 %v82, %v271
    %v273 = vpop.f32.mrb[0].mxu0
    %274 = vdwg.mxu0
    %vm275 = vcmask 130048
    %v276 = vsel %vm275, %v269, -inf
    %277 = vmax.xlane.f32.xlu0 %v276
    %v278 = vpop.xlane.xlu0 %277
    %v279 = vsel %vm275, %v272, -inf
    %280 = vmax.xlane.f32.xlu0 %v279
    %v281 = vpop.xlane.xlu0 %280
    %v282 = vsub.f32 %v269, %v278
    %v283 = vsub.f32 %v272, %v281
    %v284 = vmul.f32 %v282, 1.442695
    %v285 = vpow.pop %v284
    %v286 = vmul.f32 %v283, 1.442695
    %v287 = vpow.pop %v286
    %v288 = vsel %vm275, %v285, 0.0
    %289 = vadd.xlane.f32.xlu0 %v288
    %v290 = vpop.xlane.xlu0 %289
    %v291 = vsel %vm275, %v287, 0.0
    %292 = vadd.xlane.f32.xlu0 %v291
    %v293 = vpop.xlane.xlu0 %292
    %v294 = vrcp.pop %v290
    %v295 = vrcp.pop %v293
    %v296 = vmul.f32 %v285, %v294
    %v297 = vmul.f32 %v287, %v295
    %v298 = vpack.c.bf16 %v297, %v296
    %300 = vrot.lane.b32.xlu0 %v226, 96
    %v301 = vpop.permute.xlu0 %300
    %v304 = vsel %vm275, %v298, 0
    %306 = vmatprep.subr.bf16.mxu0 0
    %307 = vmatpush1.bf16.msra.mxu0 %v301
    %308 = vmatprep.subr.bf16.mxu0 0
    %309 = vmatpush1.bf16.msra.mxu0 0
    %310 = vmatprep.subr.bf16.mxu0 0
    %311 = vmatpush1.bf16.msra.mxu0 0
    %312 = vmatprep.subr.bf16.mxu0 0
    %313 = vmatpush1.bf16.msra.mxu0 0
    %314 = vmatprep.subr.bf16.mxu0 0
    %315 = vmatpush1.bf16.msra.mxu0 0
    %316 = vmatprep.subr.bf16.mxu0 0
    %317 = vmatpush1.bf16.msra.mxu0 0
    %318 = vmatprep.subr.bf16.mxu0 0
    %319 = vmatpush1.bf16.msra.mxu0 0
    %320 = vmatprep.subr.bf16.mxu0 0
    %321 = vmatpush1.bf16.msra.mxu0 0
    %322 = vmatprep.subr.bf16.mxu0 0
    %323 = vmatpush1.bf16.msra.mxu0 0
    %324 = vmatprep.subr.bf16.mxu0 0
    %325 = vmatpush1.bf16.msra.mxu0 0
    %326 = vmatprep.subr.bf16.mxu0 0
    %327 = vmatpush1.bf16.msra.mxu0 0
    %328 = vmatprep.subr.bf16.mxu0 0
    %329 = vmatpush1.bf16.msra.mxu0 0
    %330 = vmatprep.subr.bf16.mxu0 0
    %331 = vmatpush1.bf16.msra.mxu0 0
    %332 = vmatprep.subr.bf16.mxu0 0
    %333 = vmatpush1.bf16.msra.mxu0 0
    %334 = vmatprep.subr.bf16.mxu0 0
    %335 = vmatpush1.bf16.msra.mxu0 0
    %336 = vmatprep.subr.bf16.mxu0 0
    %337 = vmatpush1.bf16.msra.mxu0 0
    %338 = vmatprep.mubr.bf16.mxu0 0
    %339 = vmatmul.mubr.bf16.gmra.mrb[0].mxu0 %v304
    %v340 = vpop.f32.mrb[0].mxu0
    %v341 = vadd.f32 0.0, %v340
    %v342 = vpop.f32.mrb[0].mxu0
    %v343 = vpop.f32.mrb[0].mxu0
    %v344 = vadd.f32 0.0, %v343
    %v345 = vpop.f32.mrb[0].mxu0
    %346 = vdwg.mxu0
    %v347 = vpack.c.bf16 %v344, %v341
    %349 = vrot.lane.b32.xlu0 %v225, 120
    %v350 = vpop.permute.xlu0 %349
    %351 = vrot.lane.b32.xlu0 %v226, 120
    %v352 = vpop.permute.xlu0 %351
    %v354 = vsel %vm227, %v350, 0
    %v357 = vsel %vm227, %v352, 0
    %359 = vmatprep.subr.bf16.mxu0 0
    %360 = vmatpush1.bf16.xpose.msra.mxu0 %v357
    %361 = vmatprep.subr.bf16.mxu0 0
    %362 = vmatpush1.bf16.xpose.msra.mxu0 0
    %363 = vmatprep.subr.bf16.mxu0 0
    %364 = vmatpush1.bf16.xpose.msra.mxu0 0
    %365 = vmatprep.subr.bf16.mxu0 0
    %366 = vmatpush1.bf16.xpose.msra.mxu0 0
    %367 = vmatprep.subr.bf16.mxu0 0
    %368 = vmatpush1.bf16.xpose.msra.mxu0 0
    %369 = vmatprep.subr.bf16.mxu0 0
    %370 = vmatpush1.bf16.xpose.msra.mxu0 0
    %371 = vmatprep.subr.bf16.mxu0 0
    %372 = vmatpush1.bf16.xpose.msra.mxu0 0
    %373 = vmatprep.subr.bf16.mxu0 0
    %374 = vmatpush1.bf16.xpose.msra.mxu0 0
    %375 = vmatprep.subr.bf16.mxu0 0
    %376 = vmatpush1.bf16.xpose.msra.mxu0 0
    %377 = vmatprep.subr.bf16.mxu0 0
    %378 = vmatpush1.bf16.xpose.msra.mxu0 0
    %379 = vmatprep.subr.bf16.mxu0 0
    %380 = vmatpush1.bf16.xpose.msra.mxu0 0
    %381 = vmatprep.subr.bf16.mxu0 0
    %382 = vmatpush1.bf16.xpose.msra.mxu0 0
    %383 = vmatprep.subr.bf16.mxu0 0
    %384 = vmatpush1.bf16.xpose.msra.mxu0 0
    %385 = vmatprep.subr.bf16.mxu0 0
    %386 = vmatpush1.bf16.xpose.msra.mxu0 0
    %387 = vmatprep.subr.bf16.mxu0 0
    %388 = vmatpush1.bf16.xpose.msra.mxu0 0
    %389 = vmatprep.subr.bf16.mxu0 0
    %390 = vmatpush1.bf16.xpose.msra.mxu0 0
    %391 = vmatprep.mubr.bf16.mxu0 0
    %392 = vmatmul.mubr.bf16.gmra.mrb[0].mxu0 %v354
    %v393 = vpop.f32.mrb[0].mxu0
    %v394 = vadd.f32 %v81, %v393
    %v395 = vpop.f32.mrb[0].mxu0
    %v396 = vpop.f32.mrb[0].mxu0
    %v397 = vadd.f32 %v82, %v396
    %v398 = vpop.f32.mrb[0].mxu0
    %399 = vdwg.mxu0
    %v400 = vsel %vm275, %v394, -inf
    %401 = vmax.xlane.f32.xlu0 %v400
    %v402 = vpop.xlane.xlu0 %401
    %v403 = vsel %vm275, %v397, -inf
    %404 = vmax.xlane.f32.xlu0 %v403
    %v405 = vpop.xlane.xlu0 %404
    %v406 = vsub.f32 %v394, %v402
    %v407 = vsub.f32 %v397, %v405
    %v408 = vmul.f32 %v406, 1.442695
    %v409 = vpow.pop %v408
    %v410 = vmul.f32 %v407, 1.442695
    %v411 = vpow.pop %v410
    %v412 = vsel %vm275, %v409, 0.0
    %413 = vadd.xlane.f32.xlu0 %v412
    %v414 = vpop.xlane.xlu0 %413
    %v415 = vsel %vm275, %v411, 0.0
    %416 = vadd.xlane.f32.xlu0 %v415
    %v417 = vpop.xlane.xlu0 %416
    %v418 = vrcp.pop %v414
    %v419 = vrcp.pop %v417
    %v420 = vmul.f32 %v409, %v418
    %v421 = vmul.f32 %v411, %v419
    %v422 = vpack.c.bf16 %v421, %v420
    %423 = vrot.lane.b32.xlu0 %v226, 88
    %v424 = vpop.permute.xlu0 %423
    %v427 = vsel %vm275, %v422, 0
    %429 = vmatprep.subr.bf16.mxu0 0
    %430 = vmatpush1.bf16.msra.mxu0 %v424
    %431 = vmatprep.subr.bf16.mxu0 0
    %432 = vmatpush1.bf16.msra.mxu0 0
    %433 = vmatprep.subr.bf16.mxu0 0
    %434 = vmatpush1.bf16.msra.mxu0 0
    %435 = vmatprep.subr.bf16.mxu0 0
    %436 = vmatpush1.bf16.msra.mxu0 0
    %437 = vmatprep.subr.bf16.mxu0 0
    %438 = vmatpush1.bf16.msra.mxu0 0
    %439 = vmatprep.subr.bf16.mxu0 0
    %440 = vmatpush1.bf16.msra.mxu0 0
    %441 = vmatprep.subr.bf16.mxu0 0
    %442 = vmatpush1.bf16.msra.mxu0 0
    %443 = vmatprep.subr.bf16.mxu0 0
    %444 = vmatpush1.bf16.msra.mxu0 0
    %445 = vmatprep.subr.bf16.mxu0 0
    %446 = vmatpush1.bf16.msra.mxu0 0
    %447 = vmatprep.subr.bf16.mxu0 0
    %448 = vmatpush1.bf16.msra.mxu0 0
    %449 = vmatprep.subr.bf16.mxu0 0
    %450 = vmatpush1.bf16.msra.mxu0 0
    %451 = vmatprep.subr.bf16.mxu0 0
    %452 = vmatpush1.bf16.msra.mxu0 0
    %453 = vmatprep.subr.bf16.mxu0 0
    %454 = vmatpush1.bf16.msra.mxu0 0
    %455 = vmatprep.subr.bf16.mxu0 0
    %456 = vmatpush1.bf16.msra.mxu0 0
    %457 = vmatprep.subr.bf16.mxu0 0
    %458 = vmatpush1.bf16.msra.mxu0 0
    %459 = vmatprep.subr.bf16.mxu0 0
    %460 = vmatpush1.bf16.msra.mxu0 0
    %461 = vmatprep.mubr.bf16.mxu0 0
    %462 = vmatmul.mubr.bf16.gmra.mrb[0].mxu0 %v427
    %v463 = vpop.f32.mrb[0].mxu0
    %v464 = vadd.f32 0.0, %v463
    %v465 = vpop.f32.mrb[0].mxu0
    %v466 = vpop.f32.mrb[0].mxu0
    %v467 = vadd.f32 0.0, %v466
    %v468 = vpop.f32.mrb[0].mxu0
    %469 = vdwg.mxu0
    %v470 = vpack.c.bf16 %v467, %v464
    %v471 = vpack.c.b16 %v116, %v116
    %472 = vrot.lane.b32.xlu0 %v471, 32
    %v473 = vpop.permute.xlu0 %472
    %v475 = vsel %vm227, %v470, 0
    %vm477 = vcmask 1043456
    %v479 = vsel %vm477, %v473, 0
    %481 = vmatprep.subr.bf16.mxu0 0
    %482 = vmatpush1.bf16.msra.mxu0 %v479
    %483 = vmatprep.subr.bf16.mxu0 0
    %484 = vmatpush1.bf16.msra.mxu0 0
    %485 = vmatprep.subr.bf16.mxu0 0
    %486 = vmatpush1.bf16.msra.mxu0 0
    %487 = vmatprep.subr.bf16.mxu0 0
    %488 = vmatpush1.bf16.msra.mxu0 0
    %489 = vmatprep.subr.bf16.mxu0 0
    %490 = vmatpush1.bf16.msra.mxu0 0
    %491 = vmatprep.subr.bf16.mxu0 0
    %492 = vmatpush1.bf16.msra.mxu0 0
    %493 = vmatprep.subr.bf16.mxu0 0
    %494 = vmatpush1.bf16.msra.mxu0 0
    %495 = vmatprep.subr.bf16.mxu0 0
    %496 = vmatpush1.bf16.msra.mxu0 0
    %497 = vmatprep.subr.bf16.mxu0 0
    %498 = vmatpush1.bf16.msra.mxu0 0
    %499 = vmatprep.subr.bf16.mxu0 0
    %500 = vmatpush1.bf16.msra.mxu0 0
    %501 = vmatprep.subr.bf16.mxu0 0
    %502 = vmatpush1.bf16.msra.mxu0 0
    %503 = vmatprep.subr.bf16.mxu0 0
    %504 = vmatpush1.bf16.msra.mxu0 0
    %505 = vmatprep.subr.bf16.mxu0 0
    %506 = vmatpush1.bf16.msra.mxu0 0
    %507 = vmatprep.subr.bf16.mxu0 0
    %508 = vmatpush1.bf16.msra.mxu0 0
    %509 = vmatprep.subr.bf16.mxu0 0
    %510 = vmatpush1.bf16.msra.mxu0 0
    %511 = vmatprep.subr.bf16.mxu0 0
    %512 = vmatpush1.bf16.msra.mxu0 0
    %513 = vmatprep.mubr.bf16.mxu0 0
    %514 = vmatmul.mubr.bf16.gmra.mrb[0].mxu0 %v475
    %v515 = vpop.f32.mrb[0].mxu0
    %v516 = vadd.f32 0.0, %v515
    %v517 = vpop.f32.mrb[0].mxu0
    %v518 = vpop.f32.mrb[0].mxu0
    %v519 = vadd.f32 0.0, %v518
    %v520 = vpop.f32.mrb[0].mxu0
    %521 = vdwg.mxu0
    %v522 = vpack.c.b16 %v115, %v115
    %523 = vrot.lane.b32.xlu0 %v522, 32
    %v524 = vpop.permute.xlu0 %523
    %v526 = vsel %vm227, %v347, 0
    %v529 = vsel %vm477, %v524, 0
    %531 = vmatprep.subr.bf16.mxu0 0
    %532 = vmatpush1.bf16.msra.mxu0 %v529
    %533 = vmatprep.subr.bf16.mxu0 0
    %534 = vmatpush1.bf16.msra.mxu0 0
    %535 = vmatprep.subr.bf16.mxu0 0
    %536 = vmatpush1.bf16.msra.mxu0 0
    %537 = vmatprep.subr.bf16.mxu0 0
    %538 = vmatpush1.bf16.msra.mxu0 0
    %539 = vmatprep.subr.bf16.mxu0 0
    %540 = vmatpush1.bf16.msra.mxu0 0
    %541 = vmatprep.subr.bf16.mxu0 0
    %542 = vmatpush1.bf16.msra.mxu0 0
    %543 = vmatprep.subr.bf16.mxu0 0
    %544 = vmatpush1.bf16.msra.mxu0 0
    %545 = vmatprep.subr.bf16.mxu0 0
    %546 = vmatpush1.bf16.msra.mxu0 0
    %547 = vmatprep.subr.bf16.mxu0 0
    %548 = vmatpush1.bf16.msra.mxu0 0
    %549 = vmatprep.subr.bf16.mxu0 0
    %550 = vmatpush1.bf16.msra.mxu0 0
    %551 = vmatprep.subr.bf16.mxu0 0
    %552 = vmatpush1.bf16.msra.mxu0 0
    %553 = vmatprep.subr.bf16.mxu0 0
    %554 = vmatpush1.bf16.msra.mxu0 0
    %555 = vmatprep.subr.bf16.mxu0 0
    %556 = vmatpush1.bf16.msra.mxu0 0
    %557 = vmatprep.subr.bf16.mxu0 0
    %558 = vmatpush1.bf16.msra.mxu0 0
    %559 = vmatprep.subr.bf16.mxu0 0
    %560 = vmatpush1.bf16.msra.mxu0 0
    %561 = vmatprep.subr.bf16.mxu0 0
    %562 = vmatpush1.bf16.msra.mxu0 0
    %563 = vmatprep.mubr.bf16.mxu0 0
    %564 = vmatmul.mubr.bf16.gmra.mrb[0].mxu0 %v526
    %v565 = vpop.f32.mrb[0].mxu0
    %v566 = vadd.f32 %v516, %v565
    %v567 = vpop.f32.mrb[0].mxu0
    %v568 = vpop.f32.mrb[0].mxu0
    %v569 = vadd.f32 %v519, %v568
    %v570 = vpop.f32.mrb[0].mxu0
    %571 = vdwg.mxu0
    %572 = vrot.lane.b32.xlu0 %v225, 112
    %v573 = vpop.permute.xlu0 %572
    %574 = vrot.lane.b32.xlu0 %v226, 112
    %v575 = vpop.permute.xlu0 %574
    %v577 = vsel %vm227, %v573, 0
    %v580 = vsel %vm227, %v575, 0
    %582 = vmatprep.subr.bf16.mxu0 0
    %583 = vmatpush1.bf16.xpose.msra.mxu0 %v580
    %584 = vmatprep.subr.bf16.mxu0 0
    %585 = vmatpush1.bf16.xpose.msra.mxu0 0
    %586 = vmatprep.subr.bf16.mxu0 0
    %587 = vmatpush1.bf16.xpose.msra.mxu0 0
    %588 = vmatprep.subr.bf16.mxu0 0
    %589 = vmatpush1.bf16.xpose.msra.mxu0 0
    %590 = vmatprep.subr.bf16.mxu0 0
    %591 = vmatpush1.bf16.xpose.msra.mxu0 0
    %592 = vmatprep.subr.bf16.mxu0 0
    %593 = vmatpush1.bf16.xpose.msra.mxu0 0
    %594 = vmatprep.subr.bf16.mxu0 0
    %595 = vmatpush1.bf16.xpose.msra.mxu0 0
    %596 = vmatprep.subr.bf16.mxu0 0
    %597 = vmatpush1.bf16.xpose.msra.mxu0 0
    %598 = vmatprep.subr.bf16.mxu0 0
    %599 = vmatpush1.bf16.xpose.msra.mxu0 0
    %600 = vmatprep.subr.bf16.mxu0 0
    %601 = vmatpush1.bf16.xpose.msra.mxu0 0
    %602 = vmatprep.subr.bf16.mxu0 0
    %603 = vmatpush1.bf16.xpose.msra.mxu0 0
    %604 = vmatprep.subr.bf16.mxu0 0
    %605 = vmatpush1.bf16.xpose.msra.mxu0 0
    %606 = vmatprep.subr.bf16.mxu0 0
    %607 = vmatpush1.bf16.xpose.msra.mxu0 0
    %608 = vmatprep.subr.bf16.mxu0 0
    %609 = vmatpush1.bf16.xpose.msra.mxu0 0
    %610 = vmatprep.subr.bf16.mxu0 0
    %611 = vmatpush1.bf16.xpose.msra.mxu0 0
    %612 = vmatprep.subr.bf16.mxu0 0
    %613 = vmatpush1.bf16.xpose.msra.mxu0 0
    %614 = vmatprep.mubr.bf16.mxu0 0
    %615 = vmatmul.mubr.bf16.gmra.mrb[0].mxu0 %v577
    %v616 = vpop.f32.mrb[0].mxu0
    %v617 = vadd.f32 %v81, %v616
    %v618 = vpop.f32.mrb[0].mxu0
    %v619 = vpop.f32.mrb[0].mxu0
    %v620 = vadd.f32 %v82, %v619
    %v621 = vpop.f32.mrb[0].mxu0
    %622 = vdwg.mxu0
    %v623 = vsel %vm275, %v617, -inf
    %624 = vmax.xlane.f32.xlu0 %v623
    %v625 = vpop.xlane.xlu0 %624
    %v626 = vsel %vm275, %v620, -inf
    %627 = vmax.xlane.f32.xlu0 %v626
    %v628 = vpop.xlane.xlu0 %627
    %v629 = vsub.f32 %v617, %v625
    %v630 = vsub.f32 %v620, %v628
    %v631 = vmul.f32 %v629, 1.442695
    %v632 = vpow.pop %v631
    %v633 = vmul.f32 %v630, 1.442695
    %v634 = vpow.pop %v633
    %v635 = vsel %vm275, %v632, 0.0
    %636 = vadd.xlane.f32.xlu0 %v635
    %v637 = vpop.xlane.xlu0 %636
    %v638 = vsel %vm275, %v634, 0.0
    %639 = vadd.xlane.f32.xlu0 %v638
    %v640 = vpop.xlane.xlu0 %639
    %v641 = vrcp.pop %v637
    %v642 = vrcp.pop %v640
    %v643 = vmul.f32 %v632, %v641
    %v644 = vmul.f32 %v634, %v642
    %v645 = vpack.c.bf16 %v644, %v643
    %646 = vrot.lane.b32.xlu0 %v226, 80
    %v647 = vpop.permute.xlu0 %646
    %v650 = vsel %vm275, %v645, 0
    %652 = vmatprep.subr.bf16.mxu0 0
    %653 = vmatpush1.bf16.msra.mxu0 %v647
    %654 = vmatprep.subr.bf16.mxu0 0
    %655 = vmatpush1.bf16.msra.mxu0 0
    %656 = vmatprep.subr.bf16.mxu0 0
    %657 = vmatpush1.bf16.msra.mxu0 0
    %658 = vmatprep.subr.bf16.mxu0 0
    %659 = vmatpush1.bf16.msra.mxu0 0
    %660 = vmatprep.subr.bf16.mxu0 0
    %661 = vmatpush1.bf16.msra.mxu0 0
    %662 = vmatprep.subr.bf16.mxu0 0
    %663 = vmatpush1.bf16.msra.mxu0 0
    %664 = vmatprep.subr.bf16.mxu0 0
    %665 = vmatpush1.bf16.msra.mxu0 0
    %666 = vmatprep.subr.bf16.mxu0 0
    %667 = vmatpush1.bf16.msra.mxu0 0
    %668 = vmatprep.subr.bf16.mxu0 0
    %669 = vmatpush1.bf16.msra.mxu0 0
    %670 = vmatprep.subr.bf16.mxu0 0
    %671 = vmatpush1.bf16.msra.mxu0 0
    %672 = vmatprep.subr.bf16.mxu0 0
    %673 = vmatpush1.bf16.msra.mxu0 0
    %674 = vmatprep.subr.bf16.mxu0 0
    %675 = vmatpush1.bf16.msra.mxu0 0
    %676 = vmatprep.subr.bf16.mxu0 0
    %677 = vmatpush1.bf16.msra.mxu0 0
    %678 = vmatprep.subr.bf16.mxu0 0
    %679 = vmatpush1.bf16.msra.mxu0 0
    %680 = vmatprep.subr.bf16.mxu0 0
    %681 = vmatpush1.bf16.msra.mxu0 0
    %682 = vmatprep.subr.bf16.mxu0 0
    %683 = vmatpush1.bf16.msra.mxu0 0
    %684 = vmatprep.mubr.bf16.mxu0 0
    %685 = vmatmul.mubr.bf16.gmra.mrb[0].mxu0 %v650
    %v686 = vpop.f32.mrb[0].mxu0
    %v687 = vadd.f32 0.0, %v686
    %v688 = vpop.f32.mrb[0].mxu0
    %v689 = vpop.f32.mrb[0].mxu0
    %v690 = vadd.f32 0.0, %v689
    %v691 = vpop.f32.mrb[0].mxu0
    %692 = vdwg.mxu0
    %v693 = vpack.c.bf16 %v690, %v687
    %v694 = vpack.c.b16 %v117, %v117
    %695 = vrot.lane.b32.xlu0 %v694, 32
    %v696 = vpop.permute.xlu0 %695
    %v698 = vsel %vm227, %v693, 0
    %v701 = vsel %vm477, %v696, 0
    %703 = vmatprep.subr.bf16.mxu0 0
    %704 = vmatpush1.bf16.msra.mxu0 %v701
    %705 = vmatprep.subr.bf16.mxu0 0
    %706 = vmatpush1.bf16.msra.mxu0 0
    %707 = vmatprep.subr.bf16.mxu0 0
    %708 = vmatpush1.bf16.msra.mxu0 0
    %709 = vmatprep.subr.bf16.mxu0 0
    %710 = vmatpush1.bf16.msra.mxu0 0
    %711 = vmatprep.subr.bf16.mxu0 0
    %712 = vmatpush1.bf16.msra.mxu0 0
    %713 = vmatprep.subr.bf16.mxu0 0
    %714 = vmatpush1.bf16.msra.mxu0 0
    %715 = vmatprep.subr.bf16.mxu0 0
    %716 = vmatpush1.bf16.msra.mxu0 0
    %717 = vmatprep.subr.bf16.mxu0 0
    %718 = vmatpush1.bf16.msra.mxu0 0
    %719 = vmatprep.subr.bf16.mxu0 0
    %720 = vmatpush1.bf16.msra.mxu0 0
    %721 = vmatprep.subr.bf16.mxu0 0
    %722 = vmatpush1.bf16.msra.mxu0 0
    %723 = vmatprep.subr.bf16.mxu0 0
    %724 = vmatpush1.bf16.msra.mxu0 0
    %725 = vmatprep.subr.bf16.mxu0 0
    %726 = vmatpush1.bf16.msra.mxu0 0
    %727 = vmatprep.subr.bf16.mxu0 0
    %728 = vmatpush1.bf16.msra.mxu0 0
    %729 = vmatprep.subr.bf16.mxu0 0
    %730 = vmatpush1.bf16.msra.mxu0 0
    %731 = vmatprep.subr.bf16.mxu0 0
    %732 = vmatpush1.bf16.msra.mxu0 0
    %733 = vmatprep.subr.bf16.mxu0 0
    %734 = vmatpush1.bf16.msra.mxu0 0
    %735 = vmatprep.mubr.bf16.mxu0 0
    %736 = vmatmul.mubr.bf16.gmra.mrb[0].mxu0 %v698
    %v737 = vpop.f32.mrb[0].mxu0
    %v738 = vadd.f32 0.0, %v737
    %v739 = vpop.f32.mrb[0].mxu0
    %v740 = vpop.f32.mrb[0].mxu0
    %v741 = vadd.f32 0.0, %v740
    %v742 = vpop.f32.mrb[0].mxu0
    %743 = vdwg.mxu0
    %v744 = vadd.f32 %v566, %v738
    %v745 = vadd.f32 %v569, %v741
    %746 = vrot.lane.b32.xlu0 %v225, 104
    %v747 = vpop.permute.xlu0 %746
    %748 = vrot.lane.b32.xlu0 %v226, 104
    %v749 = vpop.permute.xlu0 %748
    %v751 = vsel %vm227, %v747, 0
    %v754 = vsel %vm227, %v749, 0
    %756 = vmatprep.subr.bf16.mxu0 0
    %757 = vmatpush1.bf16.xpose.msra.mxu0 %v754
    %758 = vmatprep.subr.bf16.mxu0 0
    %759 = vmatpush1.bf16.xpose.msra.mxu0 0
    %760 = vmatprep.subr.bf16.mxu0 0
    %761 = vmatpush1.bf16.xpose.msra.mxu0 0
    %762 = vmatprep.subr.bf16.mxu0 0
    %763 = vmatpush1.bf16.xpose.msra.mxu0 0
    %764 = vmatprep.subr.bf16.mxu0 0
    %765 = vmatpush1.bf16.xpose.msra.mxu0 0
    %766 = vmatprep.subr.bf16.mxu0 0
    %767 = vmatpush1.bf16.xpose.msra.mxu0 0
    %768 = vmatprep.subr.bf16.mxu0 0
    %769 = vmatpush1.bf16.xpose.msra.mxu0 0
    %770 = vmatprep.subr.bf16.mxu0 0
    %771 = vmatpush1.bf16.xpose.msra.mxu0 0
    %772 = vmatprep.subr.bf16.mxu0 0
    %773 = vmatpush1.bf16.xpose.msra.mxu0 0
    %774 = vmatprep.subr.bf16.mxu0 0
    %775 = vmatpush1.bf16.xpose.msra.mxu0 0
    %776 = vmatprep.subr.bf16.mxu0 0
    %777 = vmatpush1.bf16.xpose.msra.mxu0 0
    %778 = vmatprep.subr.bf16.mxu0 0
    %779 = vmatpush1.bf16.xpose.msra.mxu0 0
    %780 = vmatprep.subr.bf16.mxu0 0
    %781 = vmatpush1.bf16.xpose.msra.mxu0 0
    %782 = vmatprep.subr.bf16.mxu0 0
    %783 = vmatpush1.bf16.xpose.msra.mxu0 0
    %784 = vmatprep.subr.bf16.mxu0 0
    %785 = vmatpush1.bf16.xpose.msra.mxu0 0
    %786 = vmatprep.subr.bf16.mxu0 0
    %787 = vmatpush1.bf16.xpose.msra.mxu0 0
    %788 = vmatprep.mubr.bf16.mxu0 0
    %789 = vmatmul.mubr.bf16.gmra.mrb[0].mxu0 %v751
    %v790 = vpop.f32.mrb[0].mxu0
    %v791 = vadd.f32 %v81, %v790
    %v792 = vpop.f32.mrb[0].mxu0
    %v793 = vpop.f32.mrb[0].mxu0
    %v794 = vadd.f32 %v82, %v793
    %v795 = vpop.f32.mrb[0].mxu0
    %796 = vdwg.mxu0
    %v797 = vsel %vm275, %v791, -inf
    %798 = vmax.xlane.f32.xlu0 %v797
    %v799 = vpop.xlane.xlu0 %798
    %v800 = vsel %vm275, %v794, -inf
    %801 = vmax.xlane.f32.xlu0 %v800
    %v802 = vpop.xlane.xlu0 %801
    %v803 = vsub.f32 %v791, %v799
    %v804 = vsub.f32 %v794, %v802
    %v805 = vmul.f32 %v803, 1.442695
    %v806 = vpow.pop %v805
    %v807 = vmul.f32 %v804, 1.442695
    %v808 = vpow.pop %v807
    %v809 = vsel %vm275, %v806, 0.0
    %810 = vadd.xlane.f32.xlu0 %v809
    %v811 = vpop.xlane.xlu0 %810
    %v812 = vsel %vm275, %v808, 0.0
    %813 = vadd.xlane.f32.xlu0 %v812
    %v814 = vpop.xlane.xlu0 %813
    %v815 = vrcp.pop %v811
    %v816 = vrcp.pop %v814
    %v817 = vmul.f32 %v806, %v815
    %v818 = vmul.f32 %v808, %v816
    %v819 = vpack.c.bf16 %v818, %v817
    %820 = vrot.lane.b32.xlu0 %v226, 72
    %v821 = vpop.permute.xlu0 %820
    %v824 = vsel %vm275, %v819, 0
    %826 = vmatprep.subr.bf16.mxu0 0
    %827 = vmatpush1.bf16.msra.mxu0 %v821
    %828 = vmatprep.subr.bf16.mxu0 0
    %829 = vmatpush1.bf16.msra.mxu0 0
    %830 = vmatprep.subr.bf16.mxu0 0
    %831 = vmatpush1.bf16.msra.mxu0 0
    %832 = vmatprep.subr.bf16.mxu0 0
    %833 = vmatpush1.bf16.msra.mxu0 0
    %834 = vmatprep.subr.bf16.mxu0 0
    %835 = vmatpush1.bf16.msra.mxu0 0
    %836 = vmatprep.subr.bf16.mxu0 0
    %837 = vmatpush1.bf16.msra.mxu0 0
    %838 = vmatprep.subr.bf16.mxu0 0
    %839 = vmatpush1.bf16.msra.mxu0 0
    %840 = vmatprep.subr.bf16.mxu0 0
    %841 = vmatpush1.bf16.msra.mxu0 0
    %842 = vmatprep.subr.bf16.mxu0 0
    %843 = vmatpush1.bf16.msra.mxu0 0
    %844 = vmatprep.subr.bf16.mxu0 0
    %845 = vmatpush1.bf16.msra.mxu0 0
    %846 = vmatprep.subr.bf16.mxu0 0
    %847 = vmatpush1.bf16.msra.mxu0 0
    %848 = vmatprep.subr.bf16.mxu0 0
    %849 = vmatpush1.bf16.msra.mxu0 0
    %850 = vmatprep.subr.bf16.mxu0 0
    %851 = vmatpush1.bf16.msra.mxu0 0
    %852 = vmatprep.subr.bf16.mxu0 0
    %853 = vmatpush1.bf16.msra.mxu0 0
    %854 = vmatprep.subr.bf16.mxu0 0
    %855 = vmatpush1.bf16.msra.mxu0 0
    %856 = vmatprep.subr.bf16.mxu0 0
    %857 = vmatpush1.bf16.msra.mxu0 0
    %858 = vmatprep.mubr.bf16.mxu0 0
    %859 = vmatmul.mubr.bf16.gmra.mrb[0].mxu0 %v824
    %v860 = vpop.f32.mrb[0].mxu0
    %v861 = vadd.f32 0.0, %v860
    %v862 = vpop.f32.mrb[0].mxu0
    %v863 = vpop.f32.mrb[0].mxu0
    %v864 = vadd.f32 0.0, %v863
    %v865 = vpop.f32.mrb[0].mxu0
    %866 = vdwg.mxu0
    %v867 = vpack.c.bf16 %v864, %v861
    %v868 = vpack.c.b16 %v118, %v118
    %869 = vrot.lane.b32.xlu0 %v868, 32
    %v870 = vpop.permute.xlu0 %869
    %v872 = vsel %vm227, %v867, 0
    %v875 = vsel %vm477, %v870, 0
    %877 = vmatprep.subr.bf16.mxu0 0
    %878 = vmatpush1.bf16.msra.mxu0 %v875
    %879 = vmatprep.subr.bf16.mxu0 0
    %880 = vmatpush1.bf16.msra.mxu0 0
    %881 = vmatprep.subr.bf16.mxu0 0
    %882 = vmatpush1.bf16.msra.mxu0 0
    %883 = vmatprep.subr.bf16.mxu0 0
    %884 = vmatpush1.bf16.msra.mxu0 0
    %885 = vmatprep.subr.bf16.mxu0 0
    %886 = vmatpush1.bf16.msra.mxu0 0
    %887 = vmatprep.subr.bf16.mxu0 0
    %888 = vmatpush1.bf16.msra.mxu0 0
    %889 = vmatprep.subr.bf16.mxu0 0
    %890 = vmatpush1.bf16.msra.mxu0 0
    %891 = vmatprep.subr.bf16.mxu0 0
    %892 = vmatpush1.bf16.msra.mxu0 0
    %893 = vmatprep.subr.bf16.mxu0 0
    %894 = vmatpush1.bf16.msra.mxu0 0
    %895 = vmatprep.subr.bf16.mxu0 0
    %896 = vmatpush1.bf16.msra.mxu0 0
    %897 = vmatprep.subr.bf16.mxu0 0
    %898 = vmatpush1.bf16.msra.mxu0 0
    %899 = vmatprep.subr.bf16.mxu0 0
    %900 = vmatpush1.bf16.msra.mxu0 0
    %901 = vmatprep.subr.bf16.mxu0 0
    %902 = vmatpush1.bf16.msra.mxu0 0
    %903 = vmatprep.subr.bf16.mxu0 0
    %904 = vmatpush1.bf16.msra.mxu0 0
    %905 = vmatprep.subr.bf16.mxu0 0
    %906 = vmatpush1.bf16.msra.mxu0 0
    %907 = vmatprep.subr.bf16.mxu0 0
    %908 = vmatpush1.bf16.msra.mxu0 0
    %909 = vmatprep.mubr.bf16.mxu0 0
    %910 = vmatmul.mubr.bf16.gmra.mrb[0].mxu0 %v872
    %v911 = vpop.f32.mrb[0].mxu0
    %v912 = vadd.f32 0.0, %v911
    %v913 = vpop.f32.mrb[0].mxu0
    %v914 = vpop.f32.mrb[0].mxu0
    %v915 = vadd.f32 0.0, %v914
    %v916 = vpop.f32.mrb[0].mxu0
    %917 = vdwg.mxu0
    %v918 = vadd.f32 %v744, %v912
    %v919 = vadd.f32 %v745, %v915
    %v920 = vadd.f32 %v77, %v918
    %v921 = vadd.f32 %v78, %v919
    %v922 = vlaneseq
    %v923 = vshrl.u32 %v922, 7
    %v924 = vsub.s32 0, %v923
    %v925 = vrot.slane %v101, %v924
    %v926 = vadd.f32 %v920, %v925
    %v927 = vadd.f32 %v921, %v925
    %v928 = vsel %vm123, %v926, 0.0
    %929 = vadd.xlane.f32.xlu0 %v928
    %v930 = vpop.xlane.xlu0 %929
    %v931 = vsel %vm123, %v927, 0.0
    %932 = vadd.xlane.f32.xlu0 %v931
    %v933 = vpop.xlane.xlu0 %932
    %v934 = vrcp.pop 32.0
    %v935 = vmul.f32 %v930, %v934
    %v936 = vmul.f32 %v933, %v934
    %v937 = vsub.f32 %v926, %v935
    %v938 = vsub.f32 %v927, %v936
    %v939 = vmul.f32 %v937, %v937
    %v940 = vmul.f32 %v938, %v938
    %v941 = vsel %vm123, %v939, 0.0
    %942 = vadd.xlane.f32.xlu0 %v941
    %v943 = vpop.xlane.xlu0 %942
    %v944 = vsel %vm123, %v940, 0.0
    %945 = vadd.xlane.f32.xlu0 %v944
    %v946 = vpop.xlane.xlu0 %945
    %v947 = vmul.f32 %v943, 0.032258064
    %v948 = vmul.f32 %v946, 0.032258064
    %v949 = vrsqrt.pop %v947
    %v950 = vmul.f32 %v947, %v949
    %vm951 = vcmp.eq.f32.partialorder %v947, inf
    %v952 = vsel %vm951, %v947, %v950
    %vm953 = vcmp.eq.f32.partialorder %v947, 0.0
    %v954 = vand.u32 %v947, 2147483648
    %v955 = vsel %vm953, %v954, %v952
    %v956 = vrsqrt.pop %v948
    %v957 = vmul.f32 %v948, %v956
    %vm958 = vcmp.eq.f32.partialorder %v948, inf
    %v959 = vsel %vm958, %v948, %v957
    %vm960 = vcmp.eq.f32.partialorder %v948, 0.0
    %v961 = vand.u32 %v948, 2147483648
    %v962 = vsel %vm960, %v961, %v959
    %v963 = vadd.f32 %v955, 1e-06
    %v964 = vadd.f32 %v962, 1e-06
    %v965 = vrcp.pop %v963
    %v966 = vrcp.pop %v964
    %v967 = vlaneseq
    %v968 = vshrl.u32 %v967, 7
    %v969 = vsub.s32 0, %v968
    %v970 = vrot.slane %v102, %v969
    %v971 = vmul.f32 %v970, %v937
    %v972 = vmul.f32 %v970, %v938
    %v973 = vmul.f32 %v971, %v965
    %v974 = vmul.f32 %v972, %v966
    %v975 = vlaneseq
    %v976 = vshrl.u32 %v975, 7
    %v977 = vsub.s32 0, %v976
    %v978 = vrot.slane %v103, %v977
    %v979 = vadd.f32 %v973, %v978
    %v980 = vadd.f32 %v974, %v978
    %v981 = vpack.c.bf16 %v980, %v979
    %v982 = vlaneseq
    %v983 = vshrl.u32 %v982, 7
    %v984 = vsub.s32 0, %v983
    %v985 = vrot.slane %v104, %v984
    %v990 = vunpack.c.l.b16 %v87
    %v991 = vunpack.c.l.b16 %v88
    %v992 = vunpack.c.l.b16 %v89
    %v993 = vunpack.c.l.b16 %v90
    %v994 = vpack.c.b16 %v991, %v990
    %v995 = vpack.c.b16 %v993, %v992
    %v999 = vsel %vm123, %v981, 0
    %1001 = vmatprep.subr.bf16.mxu0 0
    %1002 = vmatpush1.bf16.msra.mxu0 %v994
    %1003 = vmatprep.subr.bf16.mxu0 0
    %1004 = vmatpush1.bf16.msra.mxu0 %v995
    %1005 = vmatprep.subr.bf16.mxu0 0
    %1006 = vmatpush1.bf16.msra.mxu0 0
    %1007 = vmatprep.subr.bf16.mxu0 0
    %1008 = vmatpush1.bf16.msra.mxu0 0
    %1009 = vmatprep.subr.bf16.mxu0 0
    %1010 = vmatpush1.bf16.msra.mxu0 0
    %1011 = vmatprep.subr.bf16.mxu0 0
    %1012 = vmatpush1.bf16.msra.mxu0 0
    %1013 = vmatprep.subr.bf16.mxu0 0
    %1014 = vmatpush1.bf16.msra.mxu0 0
    %1015 = vmatprep.subr.bf16.mxu0 0
    %1016 = vmatpush1.bf16.msra.mxu0 0
    %1017 = vmatprep.subr.bf16.mxu0 0
    %1018 = vmatpush1.bf16.msra.mxu0 0
    %1019 = vmatprep.subr.bf16.mxu0 0
    %1020 = vmatpush1.bf16.msra.mxu0 0
    %1021 = vmatprep.subr.bf16.mxu0 0
    %1022 = vmatpush1.bf16.msra.mxu0 0
    %1023 = vmatprep.subr.bf16.mxu0 0
    %1024 = vmatpush1.bf16.msra.mxu0 0
    %1025 = vmatprep.subr.bf16.mxu0 0
    %1026 = vmatpush1.bf16.msra.mxu0 0
    %1027 = vmatprep.subr.bf16.mxu0 0
    %1028 = vmatpush1.bf16.msra.mxu0 0
    %1029 = vmatprep.subr.bf16.mxu0 0
    %1030 = vmatpush1.bf16.msra.mxu0 0
    %1031 = vmatprep.subr.bf16.mxu0 0
    %1032 = vmatpush1.bf16.msra.mxu0 0
    %1033 = vmatprep.mubr.bf16.mxu0 0
    %1034 = vmatmul.mubr.bf16.gmra.mrb[0].mxu0 %v999
    %v1035 = vpop.f32.mrb[0].mxu0
    %v1036 = vadd.f32 %v985, %v1035
    %v1037 = vpop.f32.mrb[0].mxu0
    %v1038 = vpop.f32.mrb[0].mxu0
    %v1039 = vadd.f32 %v985, %v1038
    %v1040 = vpop.f32.mrb[0].mxu0
    %1041 = vdwg.mxu0
    %v1042 = vmax.f32 %v1036, 0.0
    %v1043 = vmax.f32 %v1039, 0.0
    %v1044 = vpack.c.bf16 %v1043, %v1042
    %v1045 = vlaneseq
    %v1046 = vshrl.u32 %v1045, 7
    %v1047 = vsub.s32 0, %v1046
    %v1048 = vrot.slane %v105, %v1047
    %v1057 = vunpack.c.l.b16 %v91
    %v1058 = vunpack.c.l.b16 %v92
    %v1059 = vunpack.c.l.b16 %v93
    %v1060 = vunpack.c.l.b16 %v94
    %v1061 = vunpack.c.l.b16 %v95
    %v1062 = vunpack.c.l.b16 %v96
    %v1063 = vunpack.c.l.b16 %v97
    %v1064 = vunpack.c.l.b16 %v98
    %v1065 = vpack.c.b16 %v1058, %v1057
    %v1066 = vpack.c.b16 %v1060, %v1059
    %v1067 = vpack.c.b16 %v1062, %v1061
    %v1068 = vpack.c.b16 %v1064, %v1063
    %vm1073 = vcmask 523264
    %v1075 = vsel %vm1073, %v1044, 0
    %1077 = vmatprep.subr.bf16.mxu0 0
    %1078 = vmatpush1.bf16.msra.mxu0 %v1065
    %1079 = vmatprep.subr.bf16.mxu0 0
    %1080 = vmatpush1.bf16.msra.mxu0 %v1066
    %1081 = vmatprep.subr.bf16.mxu0 0
    %1082 = vmatpush1.bf16.msra.mxu0 %v1067
    %1083 = vmatprep.subr.bf16.mxu0 0
    %1084 = vmatpush1.bf16.msra.mxu0 %v1068
    %1085 = vmatprep.subr.bf16.mxu0 0
    %1086 = vmatpush1.bf16.msra.mxu0 0
    %1087 = vmatprep.subr.bf16.mxu0 0
    %1088 = vmatpush1.bf16.msra.mxu0 0
    %1089 = vmatprep.subr.bf16.mxu0 0
    %1090 = vmatpush1.bf16.msra.mxu0 0
    %1091 = vmatprep.subr.bf16.mxu0 0
    %1092 = vmatpush1.bf16.msra.mxu0 0
    %1093 = vmatprep.subr.bf16.mxu0 0
    %1094 = vmatpush1.bf16.msra.mxu0 0
    %1095 = vmatprep.subr.bf16.mxu0 0
    %1096 = vmatpush1.bf16.msra.mxu0 0
    %1097 = vmatprep.subr.bf16.mxu0 0
    %1098 = vmatpush1.bf16.msra.mxu0 0
    %1099 = vmatprep.subr.bf16.mxu0 0
    %1100 = vmatpush1.bf16.msra.mxu0 0
    %1101 = vmatprep.subr.bf16.mxu0 0
    %1102 = vmatpush1.bf16.msra.mxu0 0
    %1103 = vmatprep.subr.bf16.mxu0 0
    %1104 = vmatpush1.bf16.msra.mxu0 0
    %1105 = vmatprep.subr.bf16.mxu0 0
    %1106 = vmatpush1.bf16.msra.mxu0 0
    %1107 = vmatprep.subr.bf16.mxu0 0
    %1108 = vmatpush1.bf16.msra.mxu0 0
    %1109 = vmatprep.mubr.bf16.mxu0 0
    %1110 = vmatmul.mubr.bf16.gmra.mrb[0].mxu0 %v1075
    %v1111 = vpop.f32.mrb[0].mxu0
    %v1112 = vadd.f32 %v1048, %v1111
    %v1113 = vpop.f32.mrb[0].mxu0
    %v1114 = vpop.f32.mrb[0].mxu0
    %v1115 = vadd.f32 %v1048, %v1114
    %v1116 = vpop.f32.mrb[0].mxu0
    %1117 = vdwg.mxu0
    %v1118 = vadd.f32 %v926, %v1112
    %v1119 = vadd.f32 %v927, %v1115
    %1120 = vst.msk [vmem:[#allocation10] sm:$0xff] %vm123, %v1118
    %1121 = vst.msk [vmem:[#allocation10 + $0x8] sm:$0xff] %vm123, %v1119
    // Predicated region
    $region38: #{tpu_custom_call.1} parent=1 // pred_check
      _
    $region39: #{tpu_custom_call.1} parent=1 // pred_check_branch
      %1123 = sbr.rel (0) target = $region41
    $region40: #{tpu_custom_call.1} parent=1 // pred_region
      %s1125 = ssub.s32 256, 256
      %1126 = vsyncadd [#allocation4], %s1125
      %s1127 = sshll.u32 [#allocation10], 4
      %s1128 = int_to_ptr.vmem [resolvable:$true] %s1127
      %1133 = dma.vmem_to_hbm [thread:$0]  %s1128, 256, %s5, [#allocation4], 128, 128, 8
    $region41: #{tpu_custom_call.1} parent=1 // pred_fallthru
      _
    // Predicated region
    $region42: #{tpu_custom_call.1} parent=1 // pred_check
      _
    $region43: #{tpu_custom_call.1} parent=1 // pred_check_branch
      %1135 = sbr.rel (0) target = $region45
    $region44: #{tpu_custom_call.1} parent=1 // pred_region
      %1136 = dma.done [#allocation4], 256
    $region45: #{tpu_custom_call.1} parent=1 // pred_fallthru
      _
    %1137 = vsyncpa [#allocation3], 1
    %1138 = vsyncpa [#allocation6], 1
    %1139 = vsyncpa [#allocation9], 1
    %1140 = vsyncpa [#allocation4], 1

</llo_original>
